<compile_context>
chip_gen: v5e
topology: v5e:2x2
jax: 0.10.0
libtpu: 0.0.40
codegen_flags: <defaults>
</compile_context>

<pallas_src>
import functools
import math

import jax
import jax.numpy as jnp
from jax.experimental import pallas as pl
from jax.experimental.pallas import tpu as pltpu


# ----------------------------------------------------------------------------- kernel
def cross_attn_kernel(q_in_ref, k_in_ref,
                      wq_ref, bq_ref,
                      wkv_ref, bkv_ref,
                      wo_ref, bo_ref,
                      out_ref, *attnw_refs,
                      num_heads, compute_dtype, lane_dense):
    f32 = jnp.float32
    cd = compute_dtype
    H = num_heads
    TB, N, Dq = q_in_ref.shape
    _, M, Dk = k_in_ref.shape
    E = bq_ref.shape[1]
    hd = E // H
    need_weights = bool(attnw_refs)

    # Flatten the batch tile into the matmul row dim so the shared-weight
    # projections run as single, larger MXU ops.
    x_q = q_in_ref[...].reshape(TB * N, Dq).astype(cd)
    x_k = k_in_ref[...].reshape(TB * M, Dk).astype(cd)

    # Fused (query_proj o in_proj_q); 1/sqrt(hd) pre-folded into weight+bias.
    q = jnp.dot(x_q, wq_ref[...], preferred_element_type=f32) + bq_ref[...]
    # Fused (key_proj o in_proj_k) and (value_proj o in_proj_v), stacked into
    # one (Dk, 2E) weight -> one wide matmul, then sliced along lanes (once).
    kv = jnp.dot(x_k, wkv_ref[...], preferred_element_type=f32) + bkv_ref[...]

    q3 = q.astype(cd).reshape(TB, N, E)
    k3 = kv[:, :E].astype(cd).reshape(TB, M, E)
    v3 = kv[:, E:].astype(cd).reshape(TB, M, E)

    out_acc = jnp.zeros((TB * N, E), f32)
    attn_sum = jnp.zeros((TB, N, M), f32) if need_weights else None

    # TODO(synk): a single head-batched einsum ('bnhd,bmhd->bhnm') would keep the
    # MXU pipeline fuller, but it needs a two-batch-dim dot_general which the
    # Mosaic lowering does not reliably support; per-head single-batch einsums
    # are used, with the lane-dim head concatenate replaced by a sum of per-head
    # output projections (Wo row slices are sublane-aligned, hd rows each).
    for h in range(H):
        sl = slice(h * hd, (h + 1) * hd)
        s = jnp.einsum("bnd,bmd->bnm", q3[:, :, sl], k3[:, :, sl],
                       preferred_element_type=f32)                  # (TB, N, M)
        s = s - jnp.max(s, axis=-1, keepdims=True)
        p = jnp.exp(s)
        # Exact reciprocal: attention rows sum to 1 (parity with torch softmax).
        p = p * pl.reciprocal(jnp.sum(p, axis=-1, keepdims=True), approx=False)
        if need_weights:
            attn_sum = attn_sum + p
        o_h = jnp.einsum("bnm,bmd->bnd", p.astype(cd), v3[:, :, sl],
                         preferred_element_type=f32)                # (TB, N, hd)
        # concat_h(o_h) @ Wo  ==  sum_h  o_h @ Wo[h*hd:(h+1)*hd, :]
        out_acc = out_acc + jnp.dot(o_h.reshape(TB * N, hd).astype(cd),
                                    wo_ref[sl, :], preferred_element_type=f32)

    out = out_acc + bo_ref[...]
    if lane_dense:
        out_ref[...] = out.reshape(TB, N * E).astype(out_ref.dtype)
    else:
        out_ref[...] = out.reshape(TB, N, E).astype(out_ref.dtype)

    if need_weights:
        # averaged over heads (PyTorch default average_attn_weights=True)
        aw = attn_sum * (1.0 / H)
        if lane_dense:
            attnw_refs[0][...] = aw.reshape(TB, N * M).astype(attnw_refs[0].dtype)
        else:
            attnw_refs[0][...] = aw.astype(attnw_refs[0].dtype)
    # TODO(synk): MultiheadAttention dropout omitted (module default dropout=0.0).
    # TODO(synk): for production-scale N/M, tile attention over key blocks
    # (flash-style online softmax, 'arbitrary' grid axis over M) so scores never
    # materialize at full (TB, H, N, M) and the kernel stays under v7x's 64 MiB.


# ----------------------------------------------------------------------------- host-side helpers
def _prepare_fused_params(params, num_heads, compute_dtype):
    """One-time host-side algebraic fusion + transpose + dtype cast."""
    E = params["wqp"].shape[0]
    hd = E // num_heads
    scale = 1.0 / math.sqrt(hd)

    w_in = params["w_in"].astype(jnp.float32)
    b_in = params["b_in"].reshape(-1).astype(jnp.float32)
    wq_i, wk_i, wv_i = w_in[:E], w_in[E:2 * E], w_in[2 * E:]
    bq_i, bk_i, bv_i = b_in[:E], b_in[E:2 * E], b_in[2 * E:]

    wqp, bqp = params["wqp"], params["bqp"].reshape(-1)
    wkp, bkp = params["wkp"], params["bkp"].reshape(-1)
    wvp, bvp = params["wvp"], params["bvp"].reshape(-1)

    wq = (wqp.T @ wq_i.T) * scale                  # (Dq, E)
    bq = (bqp @ wq_i.T + bq_i) * scale             # (E,)
    wk = wkp.T @ wk_i.T                            # (Dk, E)
    bk = bkp @ wk_i.T + bk_i
    wv = wvp.T @ wv_i.T                            # (Dk, E)
    bv = bvp @ wv_i.T + bv_i

    wkv = jnp.concatenate([wk, wv], axis=1)        # (Dk, 2E)
    bkv = jnp.concatenate([bk, bv])                # (2E,)
    wo = params["w_out"].T                         # (E, E) pre-transposed
    bo = params["b_out"].reshape(-1)               # (E,)

    cd = compute_dtype
    return (wq.astype(cd), bq[None, :].astype(jnp.float32),
            wkv.astype(cd), bkv[None, :].astype(jnp.float32),
            wo.astype(cd), bo[None, :].astype(jnp.float32))


def _vmem_limit_bytes():
    """Explicit scoped-VMEM limit (defaults: 16 MiB v5e / 32 MiB v6e,v7x)."""
    try:
        cap = int(pltpu.get_tpu_info().vmem_capacity_bytes)
    except Exception:
        cap = 64 << 20
    return int(min(max(cap // 2, 32 << 20), 96 << 20))


def _pick_batch_tile(batch, n, m, e, dq, dk, need_weights, budget_bytes):
    """Largest divisor of `batch` whose per-step working set fits the budget.
    TB = batch (one grid step) is preferred: best for single-TC v5e/v6e; on v7x
    the ~0.35us/step saving dominates at small shapes anyway.  Candidates other
    than batch must be multiples of 8 so the lane-dense (TB, N*E) output block
    keeps its second-minor dim tile-aligned."""
    def step_bytes(tb):
        f = 4
        io = 2 * tb * (n * dq + m * dk) * f                      # dbl-buffered inputs
        io += 2 * tb * n * e * f + (2 * tb * n * m * f if need_weights else 0)
        inter = (tb * n * e + tb * m * 2 * e) * f * 2            # q / kv (+cast copies)
        attn = (3 * tb * n * m + tb * n * e) * f                 # s, p, attn_sum, out_acc
        return io + inter + attn

    cands = [tb for tb in range(1, batch + 1)
             if batch % tb == 0 and (tb == batch or tb % 8 == 0)]
    fitting = [tb for tb in cands if step_bytes(tb) <= budget_bytes]
    return max(fitting) if fitting else min(cands)


def _full_spec(arr, single_buffer):
    if single_buffer:
        # Grid-invariant weights: block index never changes, one buffer suffices.
        return pl.BlockSpec(arr.shape, lambda b: (0, 0), pipeline_mode=pl.Buffered(1))
    return pl.BlockSpec(arr.shape, lambda b: (0, 0))


def _call(query, key, fused, num_heads, compute_dtype, need_weights, fast,
          batch_tile, vmem_limit):
    B, N, Dq = query.shape
    _, M, Dk = key.shape
    E = fused[0].shape[1]
    H = num_heads
    TB = batch_tile
    grid = (B // TB,)
    lane_dense = fast

    kernel = functools.partial(cross_attn_kernel, num_heads=H,
                               compute_dtype=compute_dtype, lane_dense=lane_dense)

    in_specs = ([pl.BlockSpec((TB, N, Dq), lambda b: (b, 0, 0)),
                 pl.BlockSpec((TB, M, Dk), lambda b: (b, 0, 0))]
                + [_full_spec(a, single_buffer=fast) for a in fused])

    if lane_dense:
        out_specs = [pl.BlockSpec((TB, N * E), lambda b: (b, 0))]
        out_shape = [jax.ShapeDtypeStruct((B, N * E), jnp.float32)]
        if need_weights:
            out_specs.append(pl.BlockSpec((TB, N * M), lambda b: (b, 0)))
            out_shape.append(jax.ShapeDtypeStruct((B, N * M), jnp.float32))
    else:
        out_specs = [pl.BlockSpec((TB, N, E), lambda b: (b, 0, 0))]
        out_shape = [jax.ShapeDtypeStruct((B, N, E), jnp.float32)]
        if need_weights:
            out_specs.append(pl.BlockSpec((TB, N, M), lambda b: (b, 0, 0)))
            out_shape.append(jax.ShapeDtypeStruct((B, N, M), jnp.float32))

    flops = (2 * B * N * Dq * E + 2 * B * M * Dk * (2 * E)
             + 4 * B * N * M * E + 2 * B * N * E * E)
    transcendentals = B * H * N * M
    bytes_accessed = (4 * (B * N * Dq + B * M * Dk + B * N * E)
                      + (4 * B * N * M if need_weights else 0)
                      + 2 * (Dq * E + Dk * 2 * E + E * E) + 16 * E)
    cost = pl.CostEstimate(flops=int(flops), transcendentals=int(transcendentals),
                           bytes_accessed=int(bytes_accessed))

    results = pl.pallas_call(
        kernel,
        grid=grid,
        in_specs=in_specs,
        out_specs=out_specs,
        out_shape=out_shape,
        compiler_params=pltpu.CompilerParams(
            dimension_semantics=("parallel",),
            vmem_limit_bytes=vmem_limit),
        cost_estimate=cost,
    )(query, key, *fused)

    if need_weights:
        out_flat, attn_flat = results
    else:
        (out_flat,) = results
        attn_flat = None

    out = out_flat.reshape(B, N, E)
    attn = attn_flat.reshape(B, N, M) if attn_flat is not None else None
    return out, attn


def cross_attention_projection(query, key, params, num_heads,
                               compute_dtype=jnp.bfloat16, need_weights=True):
    """query: (B, N, Dq) or (N, Dq); key: (B, M, Dk) or (M, Dk)."""
    squeeze = query.ndim == 2
    if squeeze:
        query, key = query[None], key[None]

    B, N, Dq = query.shape
    _, M, Dk = key.shape
    E = params["wqp"].shape[0]
    assert E % num_heads == 0

    fused = _prepare_fused_params(params, num_heads, compute_dtype)
    vmem_limit = _vmem_limit_bytes()
    TB = _pick_batch_tile(B, N, M, E, Dq, Dk, need_weights,
                          int(vmem_limit * 0.6))

    try:
        out, attn = _call(query, key, fused, num_heads, compute_dtype,
                          need_weights, True, TB, vmem_limit)
    except Exception:
        # TODO(synk): lane-dense stores need a merge-into-lanes reshape and
        # Buffered(1) weight specs; if this Mosaic build rejects either, fall
        # back to the previously-validated natural layout (identical math).
        out, attn = _call(query, key, fused, num_heads, compute_dtype,
                          need_weights, False, TB, vmem_limit)

    if squeeze:
        out = out[0]   # PyTorch module squeezes `out`; attn_weights stay batched.
    return out, attn


# ----------------------------------------------------------------------------- reference
def reference_forward(query, key, params, num_heads):
    """Pure-JAX f32 reference mirroring the PyTorch module (for verification)."""
    if query.ndim == 2:
        query, key = query[None], key[None]
        squeeze = True
    else:
        squeeze = False
    E = params["wqp"].shape[0]
    H = num_heads
    hd = E // H

    Q = query @ params["wqp"].T + params["bqp"][0]
    K = key @ params["wkp"].T + params["bkp"][0]
    V = key @ params["wvp"].T + params["bvp"][0]

    w_in, b_in = params["w_in"], params["b_in"][0]
    q = Q @ w_in[0:E].T + b_in[0:E]
    k = K @ w_in[E:2 * E].T + b_in[E:2 * E]
    v = V @ w_in[2 * E:3 * E].T + b_in[2 * E:3 * E]

    B, N, _ = q.shape
    M = k.shape[1]
    qh = q.reshape(B, N, H, hd).transpose(0, 2, 1, 3)
    kh = k.reshape(B, M, H, hd).transpose(0, 2, 1, 3)
    vh = v.reshape(B, M, H, hd).transpose(0, 2, 1, 3)
    s = jnp.einsum("bhnd,bhmd->bhnm", qh, kh) / math.sqrt(hd)
    p = jax.nn.softmax(s, axis=-1)
    o = jnp.einsum("bhnm,bhmd->bhnd", p, vh).transpose(0, 2, 1, 3).reshape(B, N, E)
    out = o @ params["w_out"].T + params["b_out"][0]
    attn_w = p.mean(axis=1)
    if squeeze:
        out = out[0]
    return out, attn_w


def init_params(key_rng, query_in_dim, key_in_dim, embed_dim):
    ks = jax.random.split(key_rng, 12)

    def u(k, shape, fan_in):
        bound = 1.0 / math.sqrt(fan_in)
        return jax.random.uniform(k, shape, jnp.float32, -bound, bound)

    E = embed_dim
    return {
        "wqp": u(ks[0], (E, query_in_dim), query_in_dim),
        "bqp": u(ks[1], (1, E), query_in_dim),
        "wkp": u(ks[2], (E, key_in_dim), key_in_dim),
        "bkp": u(ks[3], (1, E), key_in_dim),
        "wvp": u(ks[4], (E, key_in_dim), key_in_dim),
        "bvp": u(ks[5], (1, E), key_in_dim),
        "w_in": u(ks[6], (3 * E, E), E),
        "b_in": u(ks[7], (1, 3 * E), E),
        "w_out": u(ks[8], (E, E), E),
        "b_out": u(ks[9], (1, E), E),
    }


# ----------------------------------------------------------------------------- test
if __name__ == "__main__":
    B, N, M = 4, 8, 16
    query_in_dim, key_in_dim, embed_dim, num_heads = 12, 24, 32, 4

    root = jax.random.PRNGKey(0)
    k_q, k_k, k_p = jax.random.split(root, 3)
    query = jax.random.normal(k_q, (B, N, query_in_dim), jnp.float32)
    key = jax.random.normal(k_k, (B, M, key_in_dim), jnp.float32)
    params = init_params(k_p, query_in_dim, key_in_dim, embed_dim)

    ref_out, ref_attn = reference_forward(query, key, params, num_heads)

    # bf16 fast path (MXU-native), f32 accumulation + f32 softmax.
    out, attn_w = cross_attention_projection(query, key, params, num_heads,
                                             compute_dtype=jnp.bfloat16)
    out = jax.block_until_ready(out)
    attn_w = jax.block_until_ready(attn_w)
    assert out.shape == (B, N, embed_dim)
    assert attn_w.shape == (B, N, M)
    assert jnp.allclose(out, ref_out, rtol=3e-2, atol=3e-2)
    assert jnp.allclose(attn_w, ref_attn, rtol=3e-2, atol=3e-2)

    # f32 path: tighter numerical check of the fused/restructured math.
    out32, attn32 = cross_attention_projection(query, key, params, num_heads,
                                               compute_dtype=jnp.float32)
    out32 = jax.block_until_ready(out32)
    attn32 = jax.block_until_ready(attn32)
    assert jnp.allclose(out32, ref_out, rtol=5e-3, atol=5e-3)
    assert jnp.allclose(attn32, ref_attn, rtol=5e-3, atol=5e-3)

    # need_weights=False path skips the attention-weights output entirely.
    out_nw, attn_none = cross_attention_projection(query, key, params, num_heads,
                                                   compute_dtype=jnp.bfloat16,
                                                   need_weights=False)
    out_nw = jax.block_until_ready(out_nw)
    assert attn_none is None
    assert jnp.allclose(out_nw, out, rtol=1e-5, atol=1e-5)

    # Unbatched (2-D) inputs, as supported by the PyTorch module.
    ref_out2, ref_attn2 = reference_forward(query[0], key[0], params, num_heads)
    out2, attn2 = cross_attention_projection(query[0], key[0], params, num_heads,
                                             compute_dtype=jnp.bfloat16)
    out2 = jax.block_until_ready(out2)
    attn2 = jax.block_until_ready(attn2)
    assert out2.shape == (N, embed_dim)
    assert jnp.allclose(out2, ref_out2, rtol=3e-2, atol=3e-2)
    assert jnp.allclose(attn2, ref_attn2, rtol=3e-2, atol=3e-2)

    print("KERNEL_OK")
</pallas_src>

<mosaic_0001>
module attributes {stable_mosaic.version = 11 : i64} {
  func.func @cross_attn_kernel(%arg0: i32, %arg1: memref<4x8x12xf32, #tpu.memory_space<vmem>>, %arg2: memref<4x16x24xf32, #tpu.memory_space<vmem>>, %arg3: memref<12x32xbf16, #tpu.memory_space<vmem>>, %arg4: memref<1x32xf32, #tpu.memory_space<vmem>>, %arg5: memref<24x64xbf16, #tpu.memory_space<vmem>>, %arg6: memref<1x64xf32, #tpu.memory_space<vmem>>, %arg7: memref<32x32xbf16, #tpu.memory_space<vmem>>, %arg8: memref<1x32xf32, #tpu.memory_space<vmem>>, %arg9: memref<4x256xf32, #tpu.memory_space<vmem>>, %arg10: memref<4x128xf32, #tpu.memory_space<vmem>>) attributes {dimension_semantics = [#tpu.dimension_semantics<parallel>], iteration_bounds = array<i64: 1>, scalar_prefetch = 0 : i64, scratch_operands = 0 : i64, tpu.core_type = #tpu.core_type<tc>, window_params = [{transform_indices = @transform_0, window_bounds = array<i64: 4, 8, 12>}, {transform_indices = @transform_1, window_bounds = array<i64: 4, 16, 24>}, {pipeline_mode = #tpu.pipeline_mode<synchronous>, transform_indices = @transform_2, window_bounds = array<i64: 12, 32>}, {pipeline_mode = #tpu.pipeline_mode<synchronous>, transform_indices = @transform_3, window_bounds = array<i64: 1, 32>}, {pipeline_mode = #tpu.pipeline_mode<synchronous>, transform_indices = @transform_4, window_bounds = array<i64: 24, 64>}, {pipeline_mode = #tpu.pipeline_mode<synchronous>, transform_indices = @transform_5, window_bounds = array<i64: 1, 64>}, {pipeline_mode = #tpu.pipeline_mode<synchronous>, transform_indices = @transform_6, window_bounds = array<i64: 32, 32>}, {pipeline_mode = #tpu.pipeline_mode<synchronous>, transform_indices = @transform_7, window_bounds = array<i64: 1, 32>}, {transform_indices = @transform_8, window_bounds = array<i64: 4, 256>}, {transform_indices = @transform_9, window_bounds = array<i64: 4, 128>}]} {
    %c0 = arith.constant 0 : index
    %c0_0 = arith.constant 0 : index
    %c0_1 = arith.constant 0 : index
    %0 = vector.load %arg1[%c0, %c0_0, %c0_1] : memref<4x8x12xf32, #tpu.memory_space<vmem>>, vector<4x8x12xf32>
    %1 = vector.shape_cast %0 : vector<4x8x12xf32> to vector<32x12xf32>
    %2 = arith.truncf %1 : vector<32x12xf32> to vector<32x12xbf16>
    %c0_2 = arith.constant 0 : index
    %c0_3 = arith.constant 0 : index
    %c0_4 = arith.constant 0 : index
    %3 = vector.load %arg2[%c0_2, %c0_3, %c0_4] : memref<4x16x24xf32, #tpu.memory_space<vmem>>, vector<4x16x24xf32>
    %4 = vector.shape_cast %3 : vector<4x16x24xf32> to vector<64x24xf32>
    %5 = arith.truncf %4 : vector<64x24xf32> to vector<64x24xbf16>
    %c0_5 = arith.constant 0 : index
    %c0_6 = arith.constant 0 : index
    %6 = vector.load %arg3[%c0_5, %c0_6] : memref<12x32xbf16, #tpu.memory_space<vmem>>, vector<12x32xbf16>
    %cst = arith.constant dense<0.000000e+00> : vector<32x32xf32>
    %7 = tpu.matmul %2, %6, %cst {dimension_numbers = #tpu.dot_dimension_numbers<[1], [0], [0], [1], [0, 0, 1, 1], [], []>} : vector<32x12xbf16>, vector<12x32xbf16>, vector<32x32xf32> -> vector<32x32xf32>
    %c0_7 = arith.constant 0 : index
    %c0_8 = arith.constant 0 : index
    %8 = vector.load %arg4[%c0_7, %c0_8] : memref<1x32xf32, #tpu.memory_space<vmem>>, vector<1x32xf32>
    %9 = vector.broadcast %8 : vector<1x32xf32> to vector<32x32xf32>
    %10 = arith.addf %7, %9 : vector<32x32xf32>
    %c0_9 = arith.constant 0 : index
    %c0_10 = arith.constant 0 : index
    %11 = vector.load %arg5[%c0_9, %c0_10] : memref<24x64xbf16, #tpu.memory_space<vmem>>, vector<24x64xbf16>
    %cst_11 = arith.constant dense<0.000000e+00> : vector<64x64xf32>
    %12 = tpu.matmul %5, %11, %cst_11 {dimension_numbers = #tpu.dot_dimension_numbers<[1], [0], [0], [1], [0, 0, 1, 1], [], []>} : vector<64x24xbf16>, vector<24x64xbf16>, vector<64x64xf32> -> vector<64x64xf32>
    %c0_12 = arith.constant 0 : index
    %c0_13 = arith.constant 0 : index
    %13 = vector.load %arg6[%c0_12, %c0_13] : memref<1x64xf32, #tpu.memory_space<vmem>>, vector<1x64xf32>
    %14 = vector.broadcast %13 : vector<1x64xf32> to vector<64x64xf32>
    %15 = arith.addf %12, %14 : vector<64x64xf32>
    %16 = arith.truncf %10 : vector<32x32xf32> to vector<32x32xbf16>
    %17 = vector.shape_cast %16 : vector<32x32xbf16> to vector<4x8x32xbf16>
    %18 = vector.extract_strided_slice %15 {offsets = [0, 0], sizes = [64, 32], strides = [1, 1]} : vector<64x64xf32> to vector<64x32xf32>
    %19 = arith.truncf %18 : vector<64x32xf32> to vector<64x32xbf16>
    %20 = vector.shape_cast %19 : vector<64x32xbf16> to vector<4x16x32xbf16>
    %21 = vector.extract_strided_slice %15 {offsets = [0, 32], sizes = [64, 32], strides = [1, 1]} : vector<64x64xf32> to vector<64x32xf32>
    %22 = arith.truncf %21 : vector<64x32xf32> to vector<64x32xbf16>
    %23 = vector.shape_cast %22 : vector<64x32xbf16> to vector<4x16x32xbf16>
    %cst_14 = arith.constant 0.000000e+00 : f32
    %24 = vector.broadcast %cst_14 : f32 to vector<32x32xf32>
    %cst_15 = arith.constant 0.000000e+00 : f32
    %25 = vector.broadcast %cst_15 : f32 to vector<4x8x16xf32>
    %26 = vector.extract_strided_slice %17 {offsets = [0, 0, 0], sizes = [4, 8, 8], strides = [1, 1, 1]} : vector<4x8x32xbf16> to vector<4x8x8xbf16>
    %27 = vector.extract_strided_slice %20 {offsets = [0, 0, 0], sizes = [4, 16, 8], strides = [1, 1, 1]} : vector<4x16x32xbf16> to vector<4x16x8xbf16>
    "tpu.trace_start"() <{level = 10 : i32, message = "bnd,bmd->bnm"}> : () -> ()
    %cst_16 = arith.constant dense<0.000000e+00> : vector<4x8x16xf32>
    %28 = tpu.matmul %26, %27, %cst_16 {dimension_numbers = #tpu.dot_dimension_numbers<[2], [2], [1], [1], [0, 0, 0, 1, 1, 1], [0], [0]>} : vector<4x8x8xbf16>, vector<4x16x8xbf16>, vector<4x8x16xf32> -> vector<4x8x16xf32>
    "tpu.trace_stop"() : () -> ()
    %cst_17 = arith.constant dense<0xFF800000> : vector<4x8xf32>
    %29 = vector.multi_reduction <maximumf>, %28, %cst_17 [2] : vector<4x8x16xf32> to vector<4x8xf32>
    %30 = vector.shape_cast %29 : vector<4x8xf32> to vector<4x8x1xf32>
    %31 = vector.broadcast %30 : vector<4x8x1xf32> to vector<4x8x16xf32>
    %32 = arith.subf %28, %31 : vector<4x8x16xf32>
    %33 = math.exp %32 : vector<4x8x16xf32>
    %cst_18 = arith.constant dense<0.000000e+00> : vector<4x8xf32>
    %34 = vector.multi_reduction <add>, %33, %cst_18 [2] : vector<4x8x16xf32> to vector<4x8xf32>
    %35 = vector.shape_cast %34 : vector<4x8xf32> to vector<4x8x1xf32>
    %36 = tpu.reciprocal %35 : vector<4x8x1xf32> -> vector<4x8x1xf32>
    %37 = vector.broadcast %36 : vector<4x8x1xf32> to vector<4x8x16xf32>
    %38 = arith.mulf %33, %37 : vector<4x8x16xf32>
    %39 = arith.addf %25, %38 : vector<4x8x16xf32>
    %40 = arith.truncf %38 : vector<4x8x16xf32> to vector<4x8x16xbf16>
    %41 = vector.extract_strided_slice %23 {offsets = [0, 0, 0], sizes = [4, 16, 8], strides = [1, 1, 1]} : vector<4x16x32xbf16> to vector<4x16x8xbf16>
    "tpu.trace_start"() <{level = 10 : i32, message = "bnm,bmd->bnd"}> : () -> ()
    %cst_19 = arith.constant dense<0.000000e+00> : vector<4x8x8xf32>
    %42 = tpu.matmul %40, %41, %cst_19 {dimension_numbers = #tpu.dot_dimension_numbers<[2], [1], [1], [2], [0, 0, 0, 1, 1, 2], [0], [0]>} : vector<4x8x16xbf16>, vector<4x16x8xbf16>, vector<4x8x8xf32> -> vector<4x8x8xf32>
    "tpu.trace_stop"() : () -> ()
    %43 = vector.shape_cast %42 : vector<4x8x8xf32> to vector<32x8xf32>
    %44 = arith.truncf %43 : vector<32x8xf32> to vector<32x8xbf16>
    %c0_20 = arith.constant 0 : index
    %c0_21 = arith.constant 0 : index
    %45 = vector.load %arg7[%c0_20, %c0_21] : memref<32x32xbf16, #tpu.memory_space<vmem>>, vector<8x32xbf16>
    %cst_22 = arith.constant dense<0.000000e+00> : vector<32x32xf32>
    %46 = tpu.matmul %44, %45, %cst_22 {dimension_numbers = #tpu.dot_dimension_numbers<[1], [0], [0], [1], [0, 0, 1, 1], [], []>} : vector<32x8xbf16>, vector<8x32xbf16>, vector<32x32xf32> -> vector<32x32xf32>
    %47 = arith.addf %24, %46 : vector<32x32xf32>
    %48 = vector.extract_strided_slice %17 {offsets = [0, 0, 8], sizes = [4, 8, 8], strides = [1, 1, 1]} : vector<4x8x32xbf16> to vector<4x8x8xbf16>
    %49 = vector.extract_strided_slice %20 {offsets = [0, 0, 8], sizes = [4, 16, 8], strides = [1, 1, 1]} : vector<4x16x32xbf16> to vector<4x16x8xbf16>
    "tpu.trace_start"() <{level = 10 : i32, message = "bnd,bmd->bnm"}> : () -> ()
    %cst_23 = arith.constant dense<0.000000e+00> : vector<4x8x16xf32>
    %50 = tpu.matmul %48, %49, %cst_23 {dimension_numbers = #tpu.dot_dimension_numbers<[2], [2], [1], [1], [0, 0, 0, 1, 1, 1], [0], [0]>} : vector<4x8x8xbf16>, vector<4x16x8xbf16>, vector<4x8x16xf32> -> vector<4x8x16xf32>
    "tpu.trace_stop"() : () -> ()
    %cst_24 = arith.constant dense<0xFF800000> : vector<4x8xf32>
    %51 = vector.multi_reduction <maximumf>, %50, %cst_24 [2] : vector<4x8x16xf32> to vector<4x8xf32>
    %52 = vector.shape_cast %51 : vector<4x8xf32> to vector<4x8x1xf32>
    %53 = vector.broadcast %52 : vector<4x8x1xf32> to vector<4x8x16xf32>
    %54 = arith.subf %50, %53 : vector<4x8x16xf32>
    %55 = math.exp %54 : vector<4x8x16xf32>
    %cst_25 = arith.constant dense<0.000000e+00> : vector<4x8xf32>
    %56 = vector.multi_reduction <add>, %55, %cst_25 [2] : vector<4x8x16xf32> to vector<4x8xf32>
    %57 = vector.shape_cast %56 : vector<4x8xf32> to vector<4x8x1xf32>
    %58 = tpu.reciprocal %57 : vector<4x8x1xf32> -> vector<4x8x1xf32>
    %59 = vector.broadcast %58 : vector<4x8x1xf32> to vector<4x8x16xf32>
    %60 = arith.mulf %55, %59 : vector<4x8x16xf32>
    %61 = arith.addf %39, %60 : vector<4x8x16xf32>
    %62 = arith.truncf %60 : vector<4x8x16xf32> to vector<4x8x16xbf16>
    %63 = vector.extract_strided_slice %23 {offsets = [0, 0, 8], sizes = [4, 16, 8], strides = [1, 1, 1]} : vector<4x16x32xbf16> to vector<4x16x8xbf16>
    "tpu.trace_start"() <{level = 10 : i32, message = "bnm,bmd->bnd"}> : () -> ()
    %cst_26 = arith.constant dense<0.000000e+00> : vector<4x8x8xf32>
    %64 = tpu.matmul %62, %63, %cst_26 {dimension_numbers = #tpu.dot_dimension_numbers<[2], [1], [1], [2], [0, 0, 0, 1, 1, 2], [0], [0]>} : vector<4x8x16xbf16>, vector<4x16x8xbf16>, vector<4x8x8xf32> -> vector<4x8x8xf32>
    "tpu.trace_stop"() : () -> ()
    %65 = vector.shape_cast %64 : vector<4x8x8xf32> to vector<32x8xf32>
    %66 = arith.truncf %65 : vector<32x8xf32> to vector<32x8xbf16>
    %c8 = arith.constant 8 : index
    %c0_27 = arith.constant 0 : index
    %67 = vector.load %arg7[%c8, %c0_27] : memref<32x32xbf16, #tpu.memory_space<vmem>>, vector<8x32xbf16>
    %cst_28 = arith.constant dense<0.000000e+00> : vector<32x32xf32>
    %68 = tpu.matmul %66, %67, %cst_28 {dimension_numbers = #tpu.dot_dimension_numbers<[1], [0], [0], [1], [0, 0, 1, 1], [], []>} : vector<32x8xbf16>, vector<8x32xbf16>, vector<32x32xf32> -> vector<32x32xf32>
    %69 = arith.addf %47, %68 : vector<32x32xf32>
    %70 = vector.extract_strided_slice %17 {offsets = [0, 0, 16], sizes = [4, 8, 8], strides = [1, 1, 1]} : vector<4x8x32xbf16> to vector<4x8x8xbf16>
    %71 = vector.extract_strided_slice %20 {offsets = [0, 0, 16], sizes = [4, 16, 8], strides = [1, 1, 1]} : vector<4x16x32xbf16> to vector<4x16x8xbf16>
    "tpu.trace_start"() <{level = 10 : i32, message = "bnd,bmd->bnm"}> : () -> ()
    %cst_29 = arith.constant dense<0.000000e+00> : vector<4x8x16xf32>
    %72 = tpu.matmul %70, %71, %cst_29 {dimension_numbers = #tpu.dot_dimension_numbers<[2], [2], [1], [1], [0, 0, 0, 1, 1, 1], [0], [0]>} : vector<4x8x8xbf16>, vector<4x16x8xbf16>, vector<4x8x16xf32> -> vector<4x8x16xf32>
    "tpu.trace_stop"() : () -> ()
    %cst_30 = arith.constant dense<0xFF800000> : vector<4x8xf32>
    %73 = vector.multi_reduction <maximumf>, %72, %cst_30 [2] : vector<4x8x16xf32> to vector<4x8xf32>
    %74 = vector.shape_cast %73 : vector<4x8xf32> to vector<4x8x1xf32>
    %75 = vector.broadcast %74 : vector<4x8x1xf32> to vector<4x8x16xf32>
    %76 = arith.subf %72, %75 : vector<4x8x16xf32>
    %77 = math.exp %76 : vector<4x8x16xf32>
    %cst_31 = arith.constant dense<0.000000e+00> : vector<4x8xf32>
    %78 = vector.multi_reduction <add>, %77, %cst_31 [2] : vector<4x8x16xf32> to vector<4x8xf32>
    %79 = vector.shape_cast %78 : vector<4x8xf32> to vector<4x8x1xf32>
    %80 = tpu.reciprocal %79 : vector<4x8x1xf32> -> vector<4x8x1xf32>
    %81 = vector.broadcast %80 : vector<4x8x1xf32> to vector<4x8x16xf32>
    %82 = arith.mulf %77, %81 : vector<4x8x16xf32>
    %83 = arith.addf %61, %82 : vector<4x8x16xf32>
    %84 = arith.truncf %82 : vector<4x8x16xf32> to vector<4x8x16xbf16>
    %85 = vector.extract_strided_slice %23 {offsets = [0, 0, 16], sizes = [4, 16, 8], strides = [1, 1, 1]} : vector<4x16x32xbf16> to vector<4x16x8xbf16>
    "tpu.trace_start"() <{level = 10 : i32, message = "bnm,bmd->bnd"}> : () -> ()
    %cst_32 = arith.constant dense<0.000000e+00> : vector<4x8x8xf32>
    %86 = tpu.matmul %84, %85, %cst_32 {dimension_numbers = #tpu.dot_dimension_numbers<[2], [1], [1], [2], [0, 0, 0, 1, 1, 2], [0], [0]>} : vector<4x8x16xbf16>, vector<4x16x8xbf16>, vector<4x8x8xf32> -> vector<4x8x8xf32>
    "tpu.trace_stop"() : () -> ()
    %87 = vector.shape_cast %86 : vector<4x8x8xf32> to vector<32x8xf32>
    %88 = arith.truncf %87 : vector<32x8xf32> to vector<32x8xbf16>
    %c16 = arith.constant 16 : index
    %c0_33 = arith.constant 0 : index
    %89 = vector.load %arg7[%c16, %c0_33] : memref<32x32xbf16, #tpu.memory_space<vmem>>, vector<8x32xbf16>
    %cst_34 = arith.constant dense<0.000000e+00> : vector<32x32xf32>
    %90 = tpu.matmul %88, %89, %cst_34 {dimension_numbers = #tpu.dot_dimension_numbers<[1], [0], [0], [1], [0, 0, 1, 1], [], []>} : vector<32x8xbf16>, vector<8x32xbf16>, vector<32x32xf32> -> vector<32x32xf32>
    %91 = arith.addf %69, %90 : vector<32x32xf32>
    %92 = vector.extract_strided_slice %17 {offsets = [0, 0, 24], sizes = [4, 8, 8], strides = [1, 1, 1]} : vector<4x8x32xbf16> to vector<4x8x8xbf16>
    %93 = vector.extract_strided_slice %20 {offsets = [0, 0, 24], sizes = [4, 16, 8], strides = [1, 1, 1]} : vector<4x16x32xbf16> to vector<4x16x8xbf16>
    "tpu.trace_start"() <{level = 10 : i32, message = "bnd,bmd->bnm"}> : () -> ()
    %cst_35 = arith.constant dense<0.000000e+00> : vector<4x8x16xf32>
    %94 = tpu.matmul %92, %93, %cst_35 {dimension_numbers = #tpu.dot_dimension_numbers<[2], [2], [1], [1], [0, 0, 0, 1, 1, 1], [0], [0]>} : vector<4x8x8xbf16>, vector<4x16x8xbf16>, vector<4x8x16xf32> -> vector<4x8x16xf32>
    "tpu.trace_stop"() : () -> ()
    %cst_36 = arith.constant dense<0xFF800000> : vector<4x8xf32>
    %95 = vector.multi_reduction <maximumf>, %94, %cst_36 [2] : vector<4x8x16xf32> to vector<4x8xf32>
    %96 = vector.shape_cast %95 : vector<4x8xf32> to vector<4x8x1xf32>
    %97 = vector.broadcast %96 : vector<4x8x1xf32> to vector<4x8x16xf32>
    %98 = arith.subf %94, %97 : vector<4x8x16xf32>
    %99 = math.exp %98 : vector<4x8x16xf32>
    %cst_37 = arith.constant dense<0.000000e+00> : vector<4x8xf32>
    %100 = vector.multi_reduction <add>, %99, %cst_37 [2] : vector<4x8x16xf32> to vector<4x8xf32>
    %101 = vector.shape_cast %100 : vector<4x8xf32> to vector<4x8x1xf32>
    %102 = tpu.reciprocal %101 : vector<4x8x1xf32> -> vector<4x8x1xf32>
    %103 = vector.broadcast %102 : vector<4x8x1xf32> to vector<4x8x16xf32>
    %104 = arith.mulf %99, %103 : vector<4x8x16xf32>
    %105 = arith.addf %83, %104 : vector<4x8x16xf32>
    %106 = arith.truncf %104 : vector<4x8x16xf32> to vector<4x8x16xbf16>
    %107 = vector.extract_strided_slice %23 {offsets = [0, 0, 24], sizes = [4, 16, 8], strides = [1, 1, 1]} : vector<4x16x32xbf16> to vector<4x16x8xbf16>
    "tpu.trace_start"() <{level = 10 : i32, message = "bnm,bmd->bnd"}> : () -> ()
    %cst_38 = arith.constant dense<0.000000e+00> : vector<4x8x8xf32>
    %108 = tpu.matmul %106, %107, %cst_38 {dimension_numbers = #tpu.dot_dimension_numbers<[2], [1], [1], [2], [0, 0, 0, 1, 1, 2], [0], [0]>} : vector<4x8x16xbf16>, vector<4x16x8xbf16>, vector<4x8x8xf32> -> vector<4x8x8xf32>
    "tpu.trace_stop"() : () -> ()
    %109 = vector.shape_cast %108 : vector<4x8x8xf32> to vector<32x8xf32>
    %110 = arith.truncf %109 : vector<32x8xf32> to vector<32x8xbf16>
    %c24 = arith.constant 24 : index
    %c0_39 = arith.constant 0 : index
    %111 = vector.load %arg7[%c24, %c0_39] : memref<32x32xbf16, #tpu.memory_space<vmem>>, vector<8x32xbf16>
    %cst_40 = arith.constant dense<0.000000e+00> : vector<32x32xf32>
    %112 = tpu.matmul %110, %111, %cst_40 {dimension_numbers = #tpu.dot_dimension_numbers<[1], [0], [0], [1], [0, 0, 1, 1], [], []>} : vector<32x8xbf16>, vector<8x32xbf16>, vector<32x32xf32> -> vector<32x32xf32>
    %113 = arith.addf %91, %112 : vector<32x32xf32>
    %c0_41 = arith.constant 0 : index
    %c0_42 = arith.constant 0 : index
    %114 = vector.load %arg8[%c0_41, %c0_42] : memref<1x32xf32, #tpu.memory_space<vmem>>, vector<1x32xf32>
    %115 = vector.broadcast %114 : vector<1x32xf32> to vector<32x32xf32>
    %116 = arith.addf %113, %115 : vector<32x32xf32>
    %117 = vector.shape_cast %116 : vector<32x32xf32> to vector<4x256xf32>
    %c0_43 = arith.constant 0 : index
    %c0_44 = arith.constant 0 : index
    %118 = vector.load %arg9[%c0_43, %c0_44] : memref<4x256xf32, #tpu.memory_space<vmem>>, vector<4x256xf32>
    tpu.vector_store %arg9[%c0_43, %c0_44], %117 {strides = array<i32>} : memref<4x256xf32, #tpu.memory_space<vmem>>, vector<4x256xf32>,
    %cst_45 = arith.constant 2.500000e-01 : f32
    %119 = vector.broadcast %cst_45 : f32 to vector<4x8x16xf32>
    %120 = arith.mulf %105, %119 : vector<4x8x16xf32>
    %121 = vector.shape_cast %120 : vector<4x8x16xf32> to vector<4x128xf32>
    %c0_46 = arith.constant 0 : index
    %c0_47 = arith.constant 0 : index
    %122 = vector.load %arg10[%c0_46, %c0_47] : memref<4x128xf32, #tpu.memory_space<vmem>>, vector<4x128xf32>
    tpu.vector_store %arg10[%c0_46, %c0_47], %121 {strides = array<i32>} : memref<4x128xf32, #tpu.memory_space<vmem>>, vector<4x128xf32>,
    return
  }
  func.func @transform_0(%arg0: i32) -> (i32, i32, i32) {
    %c0_i32 = arith.constant 0 : i32
    %c0_i32_0 = arith.constant 0 : i32
    %c0_i32_1 = arith.constant 0 : i32
    return %arg0, %c0_i32, %c0_i32_0 : i32, i32, i32
  }
  func.func @transform_1(%arg0: i32) -> (i32, i32, i32) {
    %c0_i32 = arith.constant 0 : i32
    %c0_i32_0 = arith.constant 0 : i32
    %c0_i32_1 = arith.constant 0 : i32
    return %arg0, %c0_i32, %c0_i32_0 : i32, i32, i32
  }
  func.func @transform_2(%arg0: i32) -> (i32, i32) {
    %c0_i32 = arith.constant 0 : i32
    %c0_i32_0 = arith.constant 0 : i32
    %c0_i32_1 = arith.constant 0 : i32
    return %c0_i32, %c0_i32_0 : i32, i32
  }
  func.func @transform_3(%arg0: i32) -> (i32, i32) {
    %c0_i32 = arith.constant 0 : i32
    %c0_i32_0 = arith.constant 0 : i32
    %c0_i32_1 = arith.constant 0 : i32
    return %c0_i32, %c0_i32_0 : i32, i32
  }
  func.func @transform_4(%arg0: i32) -> (i32, i32) {
    %c0_i32 = arith.constant 0 : i32
    %c0_i32_0 = arith.constant 0 : i32
    %c0_i32_1 = arith.constant 0 : i32
    return %c0_i32, %c0_i32_0 : i32, i32
  }
  func.func @transform_5(%arg0: i32) -> (i32, i32) {
    %c0_i32 = arith.constant 0 : i32
    %c0_i32_0 = arith.constant 0 : i32
    %c0_i32_1 = arith.constant 0 : i32
    return %c0_i32, %c0_i32_0 : i32, i32
  }
  func.func @transform_6(%arg0: i32) -> (i32, i32) {
    %c0_i32 = arith.constant 0 : i32
    %c0_i32_0 = arith.constant 0 : i32
    %c0_i32_1 = arith.constant 0 : i32
    return %c0_i32, %c0_i32_0 : i32, i32
  }
  func.func @transform_7(%arg0: i32) -> (i32, i32) {
    %c0_i32 = arith.constant 0 : i32
    %c0_i32_0 = arith.constant 0 : i32
    %c0_i32_1 = arith.constant 0 : i32
    return %c0_i32, %c0_i32_0 : i32, i32
  }
  func.func @transform_8(%arg0: i32) -> (i32, i32) {
    %c0_i32 = arith.constant 0 : i32
    %c0_i32_0 = arith.constant 0 : i32
    return %arg0, %c0_i32 : i32, i32
  }
  func.func @transform_9(%arg0: i32) -> (i32, i32) {
    %c0_i32 = arith.constant 0 : i32
    %c0_i32_0 = arith.constant 0 : i32
    return %arg0, %c0_i32 : i32, i32
  }
}

module attributes {stable_mosaic.version = 11 : i64} {
  func.func @cross_attn_kernel(%arg0: i32, %arg1: memref<4x8x12xf32, #tpu.memory_space<vmem>>, %arg2: memref<4x16x24xf32, #tpu.memory_space<vmem>>, %arg3: memref<12x32xbf16, #tpu.memory_space<vmem>>, %arg4: memref<1x32xf32, #tpu.memory_space<vmem>>, %arg5: memref<24x64xbf16, #tpu.memory_space<vmem>>, %arg6: memref<1x64xf32, #tpu.memory_space<vmem>>, %arg7: memref<32x32xbf16, #tpu.memory_space<vmem>>, %arg8: memref<1x32xf32, #tpu.memory_space<vmem>>, %arg9: memref<4x8x32xf32, #tpu.memory_space<vmem>>, %arg10: memref<4x8x16xf32, #tpu.memory_space<vmem>>) attributes {dimension_semantics = [#tpu.dimension_semantics<parallel>], iteration_bounds = array<i64: 1>, scalar_prefetch = 0 : i64, scratch_operands = 0 : i64, tpu.core_type = #tpu.core_type<tc>, window_params = [{transform_indices = @transform_0, window_bounds = array<i64: 4, 8, 12>}, {transform_indices = @transform_1, window_bounds = array<i64: 4, 16, 24>}, {pipeline_mode = #tpu.pipeline_mode<synchronous>, transform_indices = @transform_2, window_bounds = array<i64: 12, 32>}, {pipeline_mode = #tpu.pipeline_mode<synchronous>, transform_indices = @transform_3, window_bounds = array<i64: 1, 32>}, {pipeline_mode = #tpu.pipeline_mode<synchronous>, transform_indices = @transform_4, window_bounds = array<i64: 24, 64>}, {pipeline_mode = #tpu.pipeline_mode<synchronous>, transform_indices = @transform_5, window_bounds = array<i64: 1, 64>}, {pipeline_mode = #tpu.pipeline_mode<synchronous>, transform_indices = @transform_6, window_bounds = array<i64: 32, 32>}, {pipeline_mode = #tpu.pipeline_mode<synchronous>, transform_indices = @transform_7, window_bounds = array<i64: 1, 32>}, {transform_indices = @transform_8, window_bounds = array<i64: 4, 8, 32>}, {transform_indices = @transform_9, window_bounds = array<i64: 4, 8, 16>}]} {
    %c0 = arith.constant 0 : index
    %c0_0 = arith.constant 0 : index
    %c0_1 = arith.constant 0 : index
    %0 = vector.load %arg1[%c0, %c0_0, %c0_1] : memref<4x8x12xf32, #tpu.memory_space<vmem>>, vector<4x8x12xf32>
    %1 = vector.shape_cast %0 : vector<4x8x12xf32> to vector<32x12xf32>
    %2 = arith.truncf %1 : vector<32x12xf32> to vector<32x12xbf16>
    %c0_2 = arith.constant 0 : index
    %c0_3 = arith.constant 0 : index
    %c0_4 = arith.constant 0 : index
    %3 = vector.load %arg2[%c0_2, %c0_3, %c0_4] : memref<4x16x24xf32, #tpu.memory_space<vmem>>, vector<4x16x24xf32>
    %4 = vector.shape_cast %3 : vector<4x16x24xf32> to vector<64x24xf32>
    %5 = arith.truncf %4 : vector<64x24xf32> to vector<64x24xbf16>
    %c0_5 = arith.constant 0 : index
    %c0_6 = arith.constant 0 : index
    %6 = vector.load %arg3[%c0_5, %c0_6] : memref<12x32xbf16, #tpu.memory_space<vmem>>, vector<12x32xbf16>
    %cst = arith.constant dense<0.000000e+00> : vector<32x32xf32>
    %7 = tpu.matmul %2, %6, %cst {dimension_numbers = #tpu.dot_dimension_numbers<[1], [0], [0], [1], [0, 0, 1, 1], [], []>} : vector<32x12xbf16>, vector<12x32xbf16>, vector<32x32xf32> -> vector<32x32xf32>
    %c0_7 = arith.constant 0 : index
    %c0_8 = arith.constant 0 : index
    %8 = vector.load %arg4[%c0_7, %c0_8] : memref<1x32xf32, #tpu.memory_space<vmem>>, vector<1x32xf32>
    %9 = vector.broadcast %8 : vector<1x32xf32> to vector<32x32xf32>
    %10 = arith.addf %7, %9 : vector<32x32xf32>
    %c0_9 = arith.constant 0 : index
    %c0_10 = arith.constant 0 : index
    %11 = vector.load %arg5[%c0_9, %c0_10] : memref<24x64xbf16, #tpu.memory_space<vmem>>, vector<24x64xbf16>
    %cst_11 = arith.constant dense<0.000000e+00> : vector<64x64xf32>
    %12 = tpu.matmul %5, %11, %cst_11 {dimension_numbers = #tpu.dot_dimension_numbers<[1], [0], [0], [1], [0, 0, 1, 1], [], []>} : vector<64x24xbf16>, vector<24x64xbf16>, vector<64x64xf32> -> vector<64x64xf32>
    %c0_12 = arith.constant 0 : index
    %c0_13 = arith.constant 0 : index
    %13 = vector.load %arg6[%c0_12, %c0_13] : memref<1x64xf32, #tpu.memory_space<vmem>>, vector<1x64xf32>
    %14 = vector.broadcast %13 : vector<1x64xf32> to vector<64x64xf32>
    %15 = arith.addf %12, %14 : vector<64x64xf32>
    %16 = arith.truncf %10 : vector<32x32xf32> to vector<32x32xbf16>
    %17 = vector.shape_cast %16 : vector<32x32xbf16> to vector<4x8x32xbf16>
    %18 = vector.extract_strided_slice %15 {offsets = [0, 0], sizes = [64, 32], strides = [1, 1]} : vector<64x64xf32> to vector<64x32xf32>
    %19 = arith.truncf %18 : vector<64x32xf32> to vector<64x32xbf16>
    %20 = vector.shape_cast %19 : vector<64x32xbf16> to vector<4x16x32xbf16>
    %21 = vector.extract_strided_slice %15 {offsets = [0, 32], sizes = [64, 32], strides = [1, 1]} : vector<64x64xf32> to vector<64x32xf32>
    %22 = arith.truncf %21 : vector<64x32xf32> to vector<64x32xbf16>
    %23 = vector.shape_cast %22 : vector<64x32xbf16> to vector<4x16x32xbf16>
    %cst_14 = arith.constant 0.000000e+00 : f32
    %24 = vector.broadcast %cst_14 : f32 to vector<32x32xf32>
    %cst_15 = arith.constant 0.000000e+00 : f32
    %25 = vector.broadcast %cst_15 : f32 to vector<4x8x16xf32>
    %26 = vector.extract_strided_slice %17 {offsets = [0, 0, 0], sizes = [4, 8, 8], strides = [1, 1, 1]} : vector<4x8x32xbf16> to vector<4x8x8xbf16>
    %27 = vector.extract_strided_slice %20 {offsets = [0, 0, 0], sizes = [4, 16, 8], strides = [1, 1, 1]} : vector<4x16x32xbf16> to vector<4x16x8xbf16>
    "tpu.trace_start"() <{level = 10 : i32, message = "bnd,bmd->bnm"}> : () -> ()
    %cst_16 = arith.constant dense<0.000000e+00> : vector<4x8x16xf32>
    %28 = tpu.matmul %26, %27, %cst_16 {dimension_numbers = #tpu.dot_dimension_numbers<[2], [2], [1], [1], [0, 0, 0, 1, 1, 1], [0], [0]>} : vector<4x8x8xbf16>, vector<4x16x8xbf16>, vector<4x8x16xf32> -> vector<4x8x16xf32>
    "tpu.trace_stop"() : () -> ()
    %cst_17 = arith.constant dense<0xFF800000> : vector<4x8xf32>
    %29 = vector.multi_reduction <maximumf>, %28, %cst_17 [2] : vector<4x8x16xf32> to vector<4x8xf32>
    %30 = vector.shape_cast %29 : vector<4x8xf32> to vector<4x8x1xf32>
    %31 = vector.broadcast %30 : vector<4x8x1xf32> to vector<4x8x16xf32>
    %32 = arith.subf %28, %31 : vector<4x8x16xf32>
    %33 = math.exp %32 : vector<4x8x16xf32>
    %cst_18 = arith.constant dense<0.000000e+00> : vector<4x8xf32>
    %34 = vector.multi_reduction <add>, %33, %cst_18 [2] : vector<4x8x16xf32> to vector<4x8xf32>
    %35 = vector.shape_cast %34 : vector<4x8xf32> to vector<4x8x1xf32>
    %36 = tpu.reciprocal %35 : vector<4x8x1xf32> -> vector<4x8x1xf32>
    %37 = vector.broadcast %36 : vector<4x8x1xf32> to vector<4x8x16xf32>
    %38 = arith.mulf %33, %37 : vector<4x8x16xf32>
    %39 = arith.addf %25, %38 : vector<4x8x16xf32>
    %40 = arith.truncf %38 : vector<4x8x16xf32> to vector<4x8x16xbf16>
    %41 = vector.extract_strided_slice %23 {offsets = [0, 0, 0], sizes = [4, 16, 8], strides = [1, 1, 1]} : vector<4x16x32xbf16> to vector<4x16x8xbf16>
    "tpu.trace_start"() <{level = 10 : i32, message = "bnm,bmd->bnd"}> : () -> ()
    %cst_19 = arith.constant dense<0.000000e+00> : vector<4x8x8xf32>
    %42 = tpu.matmul %40, %41, %cst_19 {dimension_numbers = #tpu.dot_dimension_numbers<[2], [1], [1], [2], [0, 0, 0, 1, 1, 2], [0], [0]>} : vector<4x8x16xbf16>, vector<4x16x8xbf16>, vector<4x8x8xf32> -> vector<4x8x8xf32>
    "tpu.trace_stop"() : () -> ()
    %43 = vector.shape_cast %42 : vector<4x8x8xf32> to vector<32x8xf32>
    %44 = arith.truncf %43 : vector<32x8xf32> to vector<32x8xbf16>
    %c0_20 = arith.constant 0 : index
    %c0_21 = arith.constant 0 : index
    %45 = vector.load %arg7[%c0_20, %c0_21] : memref<32x32xbf16, #tpu.memory_space<vmem>>, vector<8x32xbf16>
    %cst_22 = arith.constant dense<0.000000e+00> : vector<32x32xf32>
    %46 = tpu.matmul %44, %45, %cst_22 {dimension_numbers = #tpu.dot_dimension_numbers<[1], [0], [0], [1], [0, 0, 1, 1], [], []>} : vector<32x8xbf16>, vector<8x32xbf16>, vector<32x32xf32> -> vector<32x32xf32>
    %47 = arith.addf %24, %46 : vector<32x32xf32>
    %48 = vector.extract_strided_slice %17 {offsets = [0, 0, 8], sizes = [4, 8, 8], strides = [1, 1, 1]} : vector<4x8x32xbf16> to vector<4x8x8xbf16>
    %49 = vector.extract_strided_slice %20 {offsets = [0, 0, 8], sizes = [4, 16, 8], strides = [1, 1, 1]} : vector<4x16x32xbf16> to vector<4x16x8xbf16>
    "tpu.trace_start"() <{level = 10 : i32, message = "bnd,bmd->bnm"}> : () -> ()
    %cst_23 = arith.constant dense<0.000000e+00> : vector<4x8x16xf32>
    %50 = tpu.matmul %48, %49, %cst_23 {dimension_numbers = #tpu.dot_dimension_numbers<[2], [2], [1], [1], [0, 0, 0, 1, 1, 1], [0], [0]>} : vector<4x8x8xbf16>, vector<4x16x8xbf16>, vector<4x8x16xf32> -> vector<4x8x16xf32>
    "tpu.trace_stop"() : () -> ()
    %cst_24 = arith.constant dense<0xFF800000> : vector<4x8xf32>
    %51 = vector.multi_reduction <maximumf>, %50, %cst_24 [2] : vector<4x8x16xf32> to vector<4x8xf32>
    %52 = vector.shape_cast %51 : vector<4x8xf32> to vector<4x8x1xf32>
    %53 = vector.broadcast %52 : vector<4x8x1xf32> to vector<4x8x16xf32>
    %54 = arith.subf %50, %53 : vector<4x8x16xf32>
    %55 = math.exp %54 : vector<4x8x16xf32>
    %cst_25 = arith.constant dense<0.000000e+00> : vector<4x8xf32>
    %56 = vector.multi_reduction <add>, %55, %cst_25 [2] : vector<4x8x16xf32> to vector<4x8xf32>
    %57 = vector.shape_cast %56 : vector<4x8xf32> to vector<4x8x1xf32>
    %58 = tpu.reciprocal %57 : vector<4x8x1xf32> -> vector<4x8x1xf32>
    %59 = vector.broadcast %58 : vector<4x8x1xf32> to vector<4x8x16xf32>
    %60 = arith.mulf %55, %59 : vector<4x8x16xf32>
    %61 = arith.addf %39, %60 : vector<4x8x16xf32>
    %62 = arith.truncf %60 : vector<4x8x16xf32> to vector<4x8x16xbf16>
    %63 = vector.extract_strided_slice %23 {offsets = [0, 0, 8], sizes = [4, 16, 8], strides = [1, 1, 1]} : vector<4x16x32xbf16> to vector<4x16x8xbf16>
    "tpu.trace_start"() <{level = 10 : i32, message = "bnm,bmd->bnd"}> : () -> ()
    %cst_26 = arith.constant dense<0.000000e+00> : vector<4x8x8xf32>
    %64 = tpu.matmul %62, %63, %cst_26 {dimension_numbers = #tpu.dot_dimension_numbers<[2], [1], [1], [2], [0, 0, 0, 1, 1, 2], [0], [0]>} : vector<4x8x16xbf16>, vector<4x16x8xbf16>, vector<4x8x8xf32> -> vector<4x8x8xf32>
    "tpu.trace_stop"() : () -> ()
    %65 = vector.shape_cast %64 : vector<4x8x8xf32> to vector<32x8xf32>
    %66 = arith.truncf %65 : vector<32x8xf32> to vector<32x8xbf16>
    %c8 = arith.constant 8 : index
    %c0_27 = arith.constant 0 : index
    %67 = vector.load %arg7[%c8, %c0_27] : memref<32x32xbf16, #tpu.memory_space<vmem>>, vector<8x32xbf16>
    %cst_28 = arith.constant dense<0.000000e+00> : vector<32x32xf32>
    %68 = tpu.matmul %66, %67, %cst_28 {dimension_numbers = #tpu.dot_dimension_numbers<[1], [0], [0], [1], [0, 0, 1, 1], [], []>} : vector<32x8xbf16>, vector<8x32xbf16>, vector<32x32xf32> -> vector<32x32xf32>
    %69 = arith.addf %47, %68 : vector<32x32xf32>
    %70 = vector.extract_strided_slice %17 {offsets = [0, 0, 16], sizes = [4, 8, 8], strides = [1, 1, 1]} : vector<4x8x32xbf16> to vector<4x8x8xbf16>
    %71 = vector.extract_strided_slice %20 {offsets = [0, 0, 16], sizes = [4, 16, 8], strides = [1, 1, 1]} : vector<4x16x32xbf16> to vector<4x16x8xbf16>
    "tpu.trace_start"() <{level = 10 : i32, message = "bnd,bmd->bnm"}> : () -> ()
    %cst_29 = arith.constant dense<0.000000e+00> : vector<4x8x16xf32>
    %72 = tpu.matmul %70, %71, %cst_29 {dimension_numbers = #tpu.dot_dimension_numbers<[2], [2], [1], [1], [0, 0, 0, 1, 1, 1], [0], [0]>} : vector<4x8x8xbf16>, vector<4x16x8xbf16>, vector<4x8x16xf32> -> vector<4x8x16xf32>
    "tpu.trace_stop"() : () -> ()
    %cst_30 = arith.constant dense<0xFF800000> : vector<4x8xf32>
    %73 = vector.multi_reduction <maximumf>, %72, %cst_30 [2] : vector<4x8x16xf32> to vector<4x8xf32>
    %74 = vector.shape_cast %73 : vector<4x8xf32> to vector<4x8x1xf32>
    %75 = vector.broadcast %74 : vector<4x8x1xf32> to vector<4x8x16xf32>
    %76 = arith.subf %72, %75 : vector<4x8x16xf32>
    %77 = math.exp %76 : vector<4x8x16xf32>
    %cst_31 = arith.constant dense<0.000000e+00> : vector<4x8xf32>
    %78 = vector.multi_reduction <add>, %77, %cst_31 [2] : vector<4x8x16xf32> to vector<4x8xf32>
    %79 = vector.shape_cast %78 : vector<4x8xf32> to vector<4x8x1xf32>
    %80 = tpu.reciprocal %79 : vector<4x8x1xf32> -> vector<4x8x1xf32>
    %81 = vector.broadcast %80 : vector<4x8x1xf32> to vector<4x8x16xf32>
    %82 = arith.mulf %77, %81 : vector<4x8x16xf32>
    %83 = arith.addf %61, %82 : vector<4x8x16xf32>
    %84 = arith.truncf %82 : vector<4x8x16xf32> to vector<4x8x16xbf16>
    %85 = vector.extract_strided_slice %23 {offsets = [0, 0, 16], sizes = [4, 16, 8], strides = [1, 1, 1]} : vector<4x16x32xbf16> to vector<4x16x8xbf16>
    "tpu.trace_start"() <{level = 10 : i32, message = "bnm,bmd->bnd"}> : () -> ()
    %cst_32 = arith.constant dense<0.000000e+00> : vector<4x8x8xf32>
    %86 = tpu.matmul %84, %85, %cst_32 {dimension_numbers = #tpu.dot_dimension_numbers<[2], [1], [1], [2], [0, 0, 0, 1, 1, 2], [0], [0]>} : vector<4x8x16xbf16>, vector<4x16x8xbf16>, vector<4x8x8xf32> -> vector<4x8x8xf32>
    "tpu.trace_stop"() : () -> ()
    %87 = vector.shape_cast %86 : vector<4x8x8xf32> to vector<32x8xf32>
    %88 = arith.truncf %87 : vector<32x8xf32> to vector<32x8xbf16>
    %c16 = arith.constant 16 : index
    %c0_33 = arith.constant 0 : index
    %89 = vector.load %arg7[%c16, %c0_33] : memref<32x32xbf16, #tpu.memory_space<vmem>>, vector<8x32xbf16>
    %cst_34 = arith.constant dense<0.000000e+00> : vector<32x32xf32>
    %90 = tpu.matmul %88, %89, %cst_34 {dimension_numbers = #tpu.dot_dimension_numbers<[1], [0], [0], [1], [0, 0, 1, 1], [], []>} : vector<32x8xbf16>, vector<8x32xbf16>, vector<32x32xf32> -> vector<32x32xf32>
    %91 = arith.addf %69, %90 : vector<32x32xf32>
    %92 = vector.extract_strided_slice %17 {offsets = [0, 0, 24], sizes = [4, 8, 8], strides = [1, 1, 1]} : vector<4x8x32xbf16> to vector<4x8x8xbf16>
    %93 = vector.extract_strided_slice %20 {offsets = [0, 0, 24], sizes = [4, 16, 8], strides = [1, 1, 1]} : vector<4x16x32xbf16> to vector<4x16x8xbf16>
    "tpu.trace_start"() <{level = 10 : i32, message = "bnd,bmd->bnm"}> : () -> ()
    %cst_35 = arith.constant dense<0.000000e+00> : vector<4x8x16xf32>
    %94 = tpu.matmul %92, %93, %cst_35 {dimension_numbers = #tpu.dot_dimension_numbers<[2], [2], [1], [1], [0, 0, 0, 1, 1, 1], [0], [0]>} : vector<4x8x8xbf16>, vector<4x16x8xbf16>, vector<4x8x16xf32> -> vector<4x8x16xf32>
    "tpu.trace_stop"() : () -> ()
    %cst_36 = arith.constant dense<0xFF800000> : vector<4x8xf32>
    %95 = vector.multi_reduction <maximumf>, %94, %cst_36 [2] : vector<4x8x16xf32> to vector<4x8xf32>
    %96 = vector.shape_cast %95 : vector<4x8xf32> to vector<4x8x1xf32>
    %97 = vector.broadcast %96 : vector<4x8x1xf32> to vector<4x8x16xf32>
    %98 = arith.subf %94, %97 : vector<4x8x16xf32>
    %99 = math.exp %98 : vector<4x8x16xf32>
    %cst_37 = arith.constant dense<0.000000e+00> : vector<4x8xf32>
    %100 = vector.multi_reduction <add>, %99, %cst_37 [2] : vector<4x8x16xf32> to vector<4x8xf32>
    %101 = vector.shape_cast %100 : vector<4x8xf32> to vector<4x8x1xf32>
    %102 = tpu.reciprocal %101 : vector<4x8x1xf32> -> vector<4x8x1xf32>
    %103 = vector.broadcast %102 : vector<4x8x1xf32> to vector<4x8x16xf32>
    %104 = arith.mulf %99, %103 : vector<4x8x16xf32>
    %105 = arith.addf %83, %104 : vector<4x8x16xf32>
    %106 = arith.truncf %104 : vector<4x8x16xf32> to vector<4x8x16xbf16>
    %107 = vector.extract_strided_slice %23 {offsets = [0, 0, 24], sizes = [4, 16, 8], strides = [1, 1, 1]} : vector<4x16x32xbf16> to vector<4x16x8xbf16>
    "tpu.trace_start"() <{level = 10 : i32, message = "bnm,bmd->bnd"}> : () -> ()
    %cst_38 = arith.constant dense<0.000000e+00> : vector<4x8x8xf32>
    %108 = tpu.matmul %106, %107, %cst_38 {dimension_numbers = #tpu.dot_dimension_numbers<[2], [1], [1], [2], [0, 0, 0, 1, 1, 2], [0], [0]>} : vector<4x8x16xbf16>, vector<4x16x8xbf16>, vector<4x8x8xf32> -> vector<4x8x8xf32>
    "tpu.trace_stop"() : () -> ()
    %109 = vector.shape_cast %108 : vector<4x8x8xf32> to vector<32x8xf32>
    %110 = arith.truncf %109 : vector<32x8xf32> to vector<32x8xbf16>
    %c24 = arith.constant 24 : index
    %c0_39 = arith.constant 0 : index
    %111 = vector.load %arg7[%c24, %c0_39] : memref<32x32xbf16, #tpu.memory_space<vmem>>, vector<8x32xbf16>
    %cst_40 = arith.constant dense<0.000000e+00> : vector<32x32xf32>
    %112 = tpu.matmul %110, %111, %cst_40 {dimension_numbers = #tpu.dot_dimension_numbers<[1], [0], [0], [1], [0, 0, 1, 1], [], []>} : vector<32x8xbf16>, vector<8x32xbf16>, vector<32x32xf32> -> vector<32x32xf32>
    %113 = arith.addf %91, %112 : vector<32x32xf32>
    %c0_41 = arith.constant 0 : index
    %c0_42 = arith.constant 0 : index
    %114 = vector.load %arg8[%c0_41, %c0_42] : memref<1x32xf32, #tpu.memory_space<vmem>>, vector<1x32xf32>
    %115 = vector.broadcast %114 : vector<1x32xf32> to vector<32x32xf32>
    %116 = arith.addf %113, %115 : vector<32x32xf32>
    %117 = vector.shape_cast %116 : vector<32x32xf32> to vector<4x8x32xf32>
    %c0_43 = arith.constant 0 : index
    %c0_44 = arith.constant 0 : index
    %c0_45 = arith.constant 0 : index
    %118 = vector.load %arg9[%c0_43, %c0_44, %c0_45] : memref<4x8x32xf32, #tpu.memory_space<vmem>>, vector<4x8x32xf32>
    tpu.vector_store %arg9[%c0_43, %c0_44, %c0_45], %117 {strides = array<i32>} : memref<4x8x32xf32, #tpu.memory_space<vmem>>, vector<4x8x32xf32>,
    %cst_46 = arith.constant 2.500000e-01 : f32
    %119 = vector.broadcast %cst_46 : f32 to vector<4x8x16xf32>
    %120 = arith.mulf %105, %119 : vector<4x8x16xf32>
    %c0_47 = arith.constant 0 : index
    %c0_48 = arith.constant 0 : index
    %c0_49 = arith.constant 0 : index
    %121 = vector.load %arg10[%c0_47, %c0_48, %c0_49] : memref<4x8x16xf32, #tpu.memory_space<vmem>>, vector<4x8x16xf32>
    tpu.vector_store %arg10[%c0_47, %c0_48, %c0_49], %120 {strides = array<i32>} : memref<4x8x16xf32, #tpu.memory_space<vmem>>, vector<4x8x16xf32>,
    return
  }
  func.func @transform_0(%arg0: i32) -> (i32, i32, i32) {
    %c0_i32 = arith.constant 0 : i32
    %c0_i32_0 = arith.constant 0 : i32
    %c0_i32_1 = arith.constant 0 : i32
    return %arg0, %c0_i32, %c0_i32_0 : i32, i32, i32
  }
  func.func @transform_1(%arg0: i32) -> (i32, i32, i32) {
    %c0_i32 = arith.constant 0 : i32
    %c0_i32_0 = arith.constant 0 : i32
    %c0_i32_1 = arith.constant 0 : i32
    return %arg0, %c0_i32, %c0_i32_0 : i32, i32, i32
  }
  func.func @transform_2(%arg0: i32) -> (i32, i32) {
    %c0_i32 = arith.constant 0 : i32
    %c0_i32_0 = arith.constant 0 : i32
    %c0_i32_1 = arith.constant 0 : i32
    return %c0_i32, %c0_i32_0 : i32, i32
  }
  func.func @transform_3(%arg0: i32) -> (i32, i32) {
    %c0_i32 = arith.constant 0 : i32
    %c0_i32_0 = arith.constant 0 : i32
    %c0_i32_1 = arith.constant 0 : i32
    return %c0_i32, %c0_i32_0 : i32, i32
  }
  func.func @transform_4(%arg0: i32) -> (i32, i32) {
    %c0_i32 = arith.constant 0 : i32
    %c0_i32_0 = arith.constant 0 : i32
    %c0_i32_1 = arith.constant 0 : i32
    return %c0_i32, %c0_i32_0 : i32, i32
  }
  func.func @transform_5(%arg0: i32) -> (i32, i32) {
    %c0_i32 = arith.constant 0 : i32
    %c0_i32_0 = arith.constant 0 : i32
    %c0_i32_1 = arith.constant 0 : i32
    return %c0_i32, %c0_i32_0 : i32, i32
  }
  func.func @transform_6(%arg0: i32) -> (i32, i32) {
    %c0_i32 = arith.constant 0 : i32
    %c0_i32_0 = arith.constant 0 : i32
    %c0_i32_1 = arith.constant 0 : i32
    return %c0_i32, %c0_i32_0 : i32, i32
  }
  func.func @transform_7(%arg0: i32) -> (i32, i32) {
    %c0_i32 = arith.constant 0 : i32
    %c0_i32_0 = arith.constant 0 : i32
    %c0_i32_1 = arith.constant 0 : i32
    return %c0_i32, %c0_i32_0 : i32, i32
  }
  func.func @transform_8(%arg0: i32) -> (i32, i32, i32) {
    %c0_i32 = arith.constant 0 : i32
    %c0_i32_0 = arith.constant 0 : i32
    %c0_i32_1 = arith.constant 0 : i32
    return %arg0, %c0_i32, %c0_i32_0 : i32, i32, i32
  }
  func.func @transform_9(%arg0: i32) -> (i32, i32, i32) {
    %c0_i32 = arith.constant 0 : i32
    %c0_i32_0 = arith.constant 0 : i32
    %c0_i32_1 = arith.constant 0 : i32
    return %arg0, %c0_i32, %c0_i32_0 : i32, i32, i32
  }
}

</mosaic_0001>

<llo_original>
// kernel: tpu_custom_call.1
$region0: #{tpu_custom_call.1}
  #allocation0 [shape = 'u32[]', space=smem, size = 0x4, offset = 0x4, fixed_abs, tag = 'smem constant byte address 0x4 - core index']
  #allocation1 [shape = 'u32[72,128]{1,0:T(1,128)}', space=vmem, size = 0x9000, scoped, tag = 'internal scratch']
  %s0 = inlined_call_operand.hbm [shape: f32[4,8,12], index: 0, kind: input, shape index: {}]
  %s1 = inlined_call_operand.hbm [shape: f32[4,16,24], index: 1, kind: input, shape index: {}]
  %s2 = inlined_call_operand.hbm [shape: bf16[12,32], index: 2, kind: input, shape index: {}]
  %s3 = inlined_call_operand.vmem [shape: f32[1,32], index: 3, kind: input, shape index: {}]
  %s4 = inlined_call_operand.hbm [shape: bf16[24,64], index: 4, kind: input, shape index: {}]
  %s5 = inlined_call_operand.vmem [shape: f32[1,64], index: 5, kind: input, shape index: {}]
  %s6 = inlined_call_operand.hbm [shape: bf16[32,32], index: 6, kind: input, shape index: {}]
  %s7 = inlined_call_operand.vmem [shape: f32[1,32], index: 7, kind: input, shape index: {}]
  %s8 = inlined_call_operand.hbm [shape: f32[4,8,32], index: 8, kind: output, shape index: {0}]
  %s9 = inlined_call_operand.hbm [shape: f32[4,8,16], index: 9, kind: output, shape index: {1}]
  %10 = xla_tuple %s8, %s9
  %s11 = sld [smem:[#allocation0]]
  $region70: #{tpu_custom_call.1} parent=0
    _
  %s13 = ssub.s32 1, %s11
  %s14 = scalar_select 0, %s13, %s11
  $region1: #{tpu_custom_call.1} parent=0
    #allocation2 [shape = 'u8[16384]{0}', space=vmem, size = 0x4000, scoped, tag = 'input window, operand 0, single buffered']
    #allocation3 [shape = 's32[1]{0}', space=sflag, size = 0x4, scoped, tag = 'scoped memory for tpu_custom_call.1']
    #allocation4 [shape = 's32[1]{0}', space=sflag, size = 0x4, scoped, tag = 'scoped memory for tpu_custom_call.1']
    #allocation5 [shape = 'u8[32768]{0}', space=vmem, size = 0x8000, scoped, tag = 'input window, operand 1, single buffered']
    #allocation6 [shape = 's32[1]{0}', space=sflag, size = 0x4, scoped, tag = 'scoped memory for tpu_custom_call.1']
    #allocation7 [shape = 'u8[4096]{0}', space=vmem, size = 0x1000, scoped, tag = 'input window, operand 2, single buffered']
    #allocation8 [shape = 'u8[6144]{0}', space=vmem, size = 0x1800, scoped, tag = 'input window, operand 4, single buffered']
    #allocation9 [shape = 's32[1]{0}', space=sflag, size = 0x4, scoped, tag = 'scoped memory for tpu_custom_call.1']
    #allocation10 [shape = 'u8[8192]{0}', space=vmem, size = 0x2000, scoped, tag = 'input window, operand 6, single buffered']
    #allocation11 [shape = 'u8[16384]{0}', space=vmem, size = 0x4000, scoped, tag = 'output window, operand 0, single buffered']
    #allocation12 [shape = 'u8[16384]{0}', space=vmem, size = 0x4000, scoped, tag = 'output window, operand 1, single buffered']
    #allocation13 [shape = 's32[1]{0}', space=sflag, size = 0x4, scoped, tag = 'scoped memory for tpu_custom_call.1']
    %15 = vsyncpa [#allocation3], 0
    %16 = vsyncpa [#allocation6], 0
    %17 = vsyncpa [#allocation9], 0
    %18 = vsyncpa [#allocation4], 0
    %19 = vsyncpa [#allocation13], 0
    // Predicated region
    $region2: #{tpu_custom_call.1} parent=1 // pred_check
      _
    $region3: #{tpu_custom_call.1} parent=1 // pred_check_branch
      %21 = sbr.rel (0) target = $region5
    $region4: #{tpu_custom_call.1} parent=1 // pred_region
      %23 = vsyncadd [#allocation3], 0
      %s24 = sshll.u32 %s0, 4
      %s25 = int_to_ptr.hbm [resolvable:$true] %s24
      %s26 = sshll.u32 [#allocation2], 4
      %s27 = int_to_ptr.vmem [resolvable:$true] %s26
      %32 = dma.hbm_to_vmem [thread:$0]  %s25, 512, %s27, [#allocation3], 128, 128, 8
    $region5: #{tpu_custom_call.1} parent=1 // pred_fallthru
      _
    // Predicated region
    $region6: #{tpu_custom_call.1} parent=1 // pred_check
      _
    $region7: #{tpu_custom_call.1} parent=1 // pred_check_branch
      %34 = sbr.rel (0) target = $region9
    $region8: #{tpu_custom_call.1} parent=1 // pred_region
      %36 = vsyncadd [#allocation6], 0
      %s37 = sshll.u32 %s1, 4
      %s38 = int_to_ptr.hbm [resolvable:$true] %s37
      %s39 = sshll.u32 [#allocation5], 4
      %s40 = int_to_ptr.vmem [resolvable:$true] %s39
      %45 = dma.hbm_to_vmem [thread:$0]  %s38, 1024, %s40, [#allocation6], 128, 128, 8
    $region9: #{tpu_custom_call.1} parent=1 // pred_fallthru
      _
    // Predicated region
    $region10: #{tpu_custom_call.1} parent=1 // pred_check
      _
    $region11: #{tpu_custom_call.1} parent=1 // pred_check_branch
      %47 = sbr.rel (0) target = $region13
    $region12: #{tpu_custom_call.1} parent=1 // pred_region
      %49 = vsyncadd [#allocation6], 0
      %s50 = sshll.u32 %s2, 4
      %s51 = int_to_ptr.hbm [resolvable:$true] %s50
      %s52 = sshll.u32 [#allocation7], 4
      %s53 = int_to_ptr.vmem [resolvable:$true] %s52
      %58 = dma.hbm_to_vmem [thread:$0]  %s51, 128, %s53, [#allocation6], 64, 64, 4
    $region13: #{tpu_custom_call.1} parent=1 // pred_fallthru
      _
    // Predicated region
    $region14: #{tpu_custom_call.1} parent=1 // pred_check
      _
    $region15: #{tpu_custom_call.1} parent=1 // pred_check_branch
      %60 = sbr.rel (0) target = $region17
    $region16: #{tpu_custom_call.1} parent=1 // pred_region
      _
    $region17: #{tpu_custom_call.1} parent=1 // pred_fallthru
      _
    // Predicated region
    $region18: #{tpu_custom_call.1} parent=1 // pred_check
      _
    $region19: #{tpu_custom_call.1} parent=1 // pred_check_branch
      %62 = sbr.rel (0) target = $region21
    $region20: #{tpu_custom_call.1} parent=1 // pred_region
      %64 = vsyncadd [#allocation9], 0
      %s65 = sshll.u32 %s4, 4
      %s66 = int_to_ptr.hbm [resolvable:$true] %s65
      %s67 = sshll.u32 [#allocation8], 4
      %s68 = int_to_ptr.vmem [resolvable:$true] %s67
      %73 = dma.hbm_to_vmem [thread:$0]  %s66, 192, %s68, [#allocation9], 64, 64, 4
    $region21: #{tpu_custom_call.1} parent=1 // pred_fallthru
      _
    // Predicated region
    $region22: #{tpu_custom_call.1} parent=1 // pred_check
      _
    $region23: #{tpu_custom_call.1} parent=1 // pred_check_branch
      %75 = sbr.rel (0) target = $region25
    $region24: #{tpu_custom_call.1} parent=1 // pred_region
      _
    $region25: #{tpu_custom_call.1} parent=1 // pred_fallthru
      _
    // Predicated region
    $region26: #{tpu_custom_call.1} parent=1 // pred_check
      _
    $region27: #{tpu_custom_call.1} parent=1 // pred_check_branch
      %77 = sbr.rel (0) target = $region29
    $region28: #{tpu_custom_call.1} parent=1 // pred_region
      %79 = vsyncadd [#allocation9], 0
      %s80 = sshll.u32 %s6, 4
      %s81 = int_to_ptr.hbm [resolvable:$true] %s80
      %s82 = sshll.u32 [#allocation10], 4
      %s83 = int_to_ptr.vmem [resolvable:$true] %s82
      %88 = dma.hbm_to_vmem [thread:$0]  %s81, 256, %s83, [#allocation9], 64, 64, 4
    $region29: #{tpu_custom_call.1} parent=1 // pred_fallthru
      _
    // Predicated region
    $region30: #{tpu_custom_call.1} parent=1 // pred_check
      _
    $region31: #{tpu_custom_call.1} parent=1 // pred_check_branch
      %90 = sbr.rel (0) target = $region33
    $region32: #{tpu_custom_call.1} parent=1 // pred_region
      _
    $region33: #{tpu_custom_call.1} parent=1 // pred_fallthru
      _
    // Predicated region
    $region34: #{tpu_custom_call.1} parent=1 // pred_check
      _
    $region35: #{tpu_custom_call.1} parent=1 // pred_check_branch
      %92 = sbr.rel (0) target = $region37
    $region36: #{tpu_custom_call.1} parent=1 // pred_region
      %94 = dma.done [#allocation3], 512
    $region37: #{tpu_custom_call.1} parent=1 // pred_fallthru
      _
    // Predicated region
    $region38: #{tpu_custom_call.1} parent=1 // pred_check
      _
    $region39: #{tpu_custom_call.1} parent=1 // pred_check_branch
      %96 = sbr.rel (0) target = $region41
    $region40: #{tpu_custom_call.1} parent=1 // pred_region
      %98 = dma.done [#allocation6], 1024
    $region41: #{tpu_custom_call.1} parent=1 // pred_fallthru
      _
    // Predicated region
    $region42: #{tpu_custom_call.1} parent=1 // pred_check
      _
    $region43: #{tpu_custom_call.1} parent=1 // pred_check_branch
      %100 = sbr.rel (0) target = $region45
    $region44: #{tpu_custom_call.1} parent=1 // pred_region
      %102 = dma.done [#allocation6], 128
    $region45: #{tpu_custom_call.1} parent=1 // pred_fallthru
      _
    // Predicated region
    $region46: #{tpu_custom_call.1} parent=1 // pred_check
      _
    $region47: #{tpu_custom_call.1} parent=1 // pred_check_branch
      %104 = sbr.rel (0) target = $region49
    $region48: #{tpu_custom_call.1} parent=1 // pred_region
      %106 = dma.done [#allocation9], 192
    $region49: #{tpu_custom_call.1} parent=1 // pred_fallthru
      _
    // Predicated region
    $region50: #{tpu_custom_call.1} parent=1 // pred_check
      _
    $region51: #{tpu_custom_call.1} parent=1 // pred_check_branch
      %108 = sbr.rel (0) target = $region53
    $region52: #{tpu_custom_call.1} parent=1 // pred_region
      %110 = dma.done [#allocation9], 256
    $region53: #{tpu_custom_call.1} parent=1 // pred_fallthru
      _
    %v112 = vld [vmem:[#allocation2] sm:$0xff]
    %v113 = vld [vmem:[#allocation2 + $0x8] sm:$0xff]
    %v114 = vld [vmem:[#allocation2 + $0x10] sm:$0xff]
    %v115 = vld [vmem:[#allocation2 + $0x18] sm:$0xff]
    %v116 = vpack.c.bf16 %v113, %v112
    %v117 = vpack.c.bf16 %v115, %v114
    %v118 = vld [vmem:[#allocation5] sm:$0xff]
    %v119 = vld [vmem:[#allocation5 + $0x8] sm:$0xff]
    %v120 = vld [vmem:[#allocation5 + $0x10] sm:$0xff]
    %v121 = vld [vmem:[#allocation5 + $0x18] sm:$0xff]
    %v122 = vld [vmem:[#allocation5 + $0x20] sm:$0xff]
    %v123 = vld [vmem:[#allocation5 + $0x28] sm:$0xff]
    %v124 = vld [vmem:[#allocation5 + $0x30] sm:$0xff]
    %v125 = vld [vmem:[#allocation5 + $0x38] sm:$0xff]
    %v126 = vpack.c.bf16 %v119, %v118
    %v127 = vpack.c.bf16 %v121, %v120
    %v128 = vpack.c.bf16 %v123, %v122
    %v129 = vpack.c.bf16 %v125, %v124
    %v130 = vld [vmem:[#allocation7] sm:$0xf]
    %v131 = vld [vmem:[#allocation7 + $0x4] sm:$0x3]
    %v132 = vld [vmem:[%s3] sm:$0x1]
    %v134 = vperm.slane %v132, 0
    %v138 = vunpack.c.l.b16 %v130
    %v139 = vunpack.c.l.b16 %v131
    %v140 = vpack.c.b16 %v139, %v138
    %vm141 = vcmask 97280
    %v143 = vsel %vm141, %v116, 0
    %v146 = vsel %vm141, %v117, 0
    %vm148 = vcmask 1045504
    %v150 = vsel %vm148, %v140, 0
    %152 = vmatpush.bf16.msra.mxu0 0
    %153 = vmatpush.bf16.msra.mxu0 0
    %154 = vmatpush.bf16.msra.mxu0 0
    %155 = vmatpush.bf16.msra.mxu0 0
    %156 = vmatpush.bf16.msra.mxu0 0
    %157 = vmatpush.bf16.msra.mxu0 0
    %158 = vmatpush.bf16.msra.mxu0 0
    %159 = vmatpush.bf16.msra.mxu0 %v150
    %160 = vmatmul.bf16.gmra.mxu0 %v143
    %v161 = vpop.f32.mrf.mxu0
    %v162 = vadd.f32 %v134, %v161
    %v163 = vpop.f32.mrf.mxu0
    %v164 = vadd.f32 %v134, %v163
    %165 = vmatmul.bf16.gmra.mxu0 %v146
    %v166 = vpop.f32.mrf.mxu0
    %v167 = vadd.f32 %v134, %v166
    %v168 = vpop.f32.mrf.mxu0
    %v169 = vadd.f32 %v134, %v168
    %170 = vdwg.mxu0
    %v171 = vld [vmem:[#allocation8] sm:$0xf]
    %v172 = vld [vmem:[#allocation8 + $0x4] sm:$0xf]
    %v173 = vld [vmem:[#allocation8 + $0x8] sm:$0xf]
    %v174 = vld [vmem:[%s5] sm:$0x1]
    %v176 = vperm.slane %v174, 0
    %v181 = vunpack.c.l.b16 %v171
    %v182 = vunpack.c.l.b16 %v172
    %v183 = vunpack.c.l.b16 %v173
    %v184 = vpack.c.b16 %v182, %v181
    %v185 = vpack.c.b16 %v183, %v183
    %vm187 = vcmask 195584
    %v189 = vsel %vm187, %v126, 0
    %v192 = vsel %vm187, %v127, 0
    %v195 = vsel %vm187, %v128, 0
    %v198 = vsel %vm187, %v129, 0
    %vm200 = vcmask 1043456
    %v202 = vsel %vm200, %v185, 0
    %204 = vmatpush.bf16.msra.mxu0 0
    %205 = vmatpush.bf16.msra.mxu0 0
    %206 = vmatpush.bf16.msra.mxu0 0
    %207 = vmatpush.bf16.msra.mxu0 0
    %208 = vmatpush.bf16.msra.mxu0 0
    %209 = vmatpush.bf16.msra.mxu0 0
    %210 = vmatpush.bf16.msra.mxu0 %v202
    %211 = vmatpush.bf16.msra.mxu0 %v184
    %212 = vmatmul.bf16.gmra.mxu0 %v189
    %v213 = vpop.f32.mrf.mxu0
    %v214 = vadd.f32 %v176, %v213
    %v215 = vpop.f32.mrf.mxu0
    %v216 = vadd.f32 %v176, %v215
    %217 = vmatmul.bf16.gmra.mxu0 %v192
    %v218 = vpop.f32.mrf.mxu0
    %v219 = vadd.f32 %v176, %v218
    %v220 = vpop.f32.mrf.mxu0
    %v221 = vadd.f32 %v176, %v220
    %222 = vmatmul.bf16.gmra.mxu0 %v195
    %v223 = vpop.f32.mrf.mxu0
    %v224 = vadd.f32 %v176, %v223
    %v225 = vpop.f32.mrf.mxu0
    %v226 = vadd.f32 %v176, %v225
    %227 = vmatmul.bf16.gmra.mxu0 %v198
    %v228 = vpop.f32.mrf.mxu0
    %v229 = vadd.f32 %v176, %v228
    %v230 = vpop.f32.mrf.mxu0
    %v231 = vadd.f32 %v176, %v230
    %232 = vdwg.mxu0
    %v233 = vpack.c.bf16 %v162, %v162
    %v234 = vpack.c.bf16 %v164, %v164
    %v235 = vpack.c.bf16 %v167, %v167
    %v236 = vpack.c.bf16 %v169, %v169
    %v237 = vpack.c.bf16 %v214, %v214
    %v238 = vpack.c.bf16 %v216, %v216
    %v239 = vpack.c.bf16 %v219, %v219
    %v240 = vpack.c.bf16 %v221, %v221
    %v241 = vpack.c.bf16 %v224, %v224
    %v242 = vpack.c.bf16 %v226, %v226
    %v243 = vpack.c.bf16 %v229, %v229
    %v244 = vpack.c.bf16 %v231, %v231
    %v247 = vunpack.c.l.b16 %v237
    %v248 = vunpack.c.l.b16 %v238
    %v249 = vpack.c.b16 %v248, %v247
    %vm250 = vcmask 64512
    %v252 = vsel %vm250, %v233, 0
    %v255 = vsel %vm250, %v249, 0
    %257 = vmatpush.bf16.xpose.msra.mxu0 0
    %258 = vmatpush.bf16.xpose.msra.mxu0 0
    %259 = vmatpush.bf16.xpose.msra.mxu0 0
    %260 = vmatpush.bf16.xpose.msra.mxu0 0
    %261 = vmatpush.bf16.xpose.msra.mxu0 0
    %262 = vmatpush.bf16.xpose.msra.mxu0 0
    %263 = vmatpush.bf16.xpose.msra.mxu0 0
    %264 = vmatpush.bf16.xpose.msra.mxu0 %v255
    %265 = vmatmul.bf16.gmra.mxu0 %v252
    %v266 = vpop.f32.mrf.mxu0
    %v267 = vadd.f32 0.0, %v266
    %v268 = vpop.f32.mrf.mxu0
    %269 = vdwg.mxu0
    %v272 = vunpack.c.l.b16 %v239
    %v273 = vunpack.c.l.b16 %v240
    %v274 = vpack.c.b16 %v273, %v272
    %v276 = vsel %vm250, %v234, 0
    %v279 = vsel %vm250, %v274, 0
    %281 = vmatpush.bf16.xpose.msra.mxu0 0
    %282 = vmatpush.bf16.xpose.msra.mxu0 0
    %283 = vmatpush.bf16.xpose.msra.mxu0 0
    %284 = vmatpush.bf16.xpose.msra.mxu0 0
    %285 = vmatpush.bf16.xpose.msra.mxu0 0
    %286 = vmatpush.bf16.xpose.msra.mxu0 0
    %287 = vmatpush.bf16.xpose.msra.mxu0 0
    %288 = vmatpush.bf16.xpose.msra.mxu0 %v279
    %289 = vmatmul.bf16.gmra.mxu0 %v276
    %v290 = vpop.f32.mrf.mxu0
    %v291 = vadd.f32 0.0, %v290
    %v292 = vpop.f32.mrf.mxu0
    %293 = vdwg.mxu0
    %v296 = vunpack.c.l.b16 %v241
    %v297 = vunpack.c.l.b16 %v242
    %v298 = vpack.c.b16 %v297, %v296
    %v300 = vsel %vm250, %v235, 0
    %v303 = vsel %vm250, %v298, 0
    %305 = vmatpush.bf16.xpose.msra.mxu0 0
    %306 = vmatpush.bf16.xpose.msra.mxu0 0
    %307 = vmatpush.bf16.xpose.msra.mxu0 0
    %308 = vmatpush.bf16.xpose.msra.mxu0 0
    %309 = vmatpush.bf16.xpose.msra.mxu0 0
    %310 = vmatpush.bf16.xpose.msra.mxu0 0
    %311 = vmatpush.bf16.xpose.msra.mxu0 0
    %312 = vmatpush.bf16.xpose.msra.mxu0 %v303
    %313 = vmatmul.bf16.gmra.mxu0 %v300
    %v314 = vpop.f32.mrf.mxu0
    %v315 = vadd.f32 0.0, %v314
    %v316 = vpop.f32.mrf.mxu0
    %317 = vdwg.mxu0
    %v320 = vunpack.c.l.b16 %v243
    %v321 = vunpack.c.l.b16 %v244
    %v322 = vpack.c.b16 %v321, %v320
    %v324 = vsel %vm250, %v236, 0
    %v327 = vsel %vm250, %v322, 0
    %329 = vmatpush.bf16.xpose.msra.mxu0 0
    %330 = vmatpush.bf16.xpose.msra.mxu0 0
    %331 = vmatpush.bf16.xpose.msra.mxu0 0
    %332 = vmatpush.bf16.xpose.msra.mxu0 0
    %333 = vmatpush.bf16.xpose.msra.mxu0 0
    %334 = vmatpush.bf16.xpose.msra.mxu0 0
    %335 = vmatpush.bf16.xpose.msra.mxu0 0
    %336 = vmatpush.bf16.xpose.msra.mxu0 %v327
    %337 = vmatmul.bf16.gmra.mxu0 %v324
    %v338 = vpop.f32.mrf.mxu0
    %v339 = vadd.f32 0.0, %v338
    %v340 = vpop.f32.mrf.mxu0
    %341 = vdwg.mxu0
    %vm342 = vcmask 130048
    %v343 = vsel %vm342, %v267, -inf
    %344 = vmax.xlane.f32.xlu0 %v343
    %v345 = vpop.xlane.xlu0 %344
    %v346 = vsel %vm342, %v291, -inf
    %347 = vmax.xlane.f32.xlu0 %v346
    %v348 = vpop.xlane.xlu0 %347
    %v349 = vsel %vm342, %v315, -inf
    %350 = vmax.xlane.f32.xlu0 %v349
    %v351 = vpop.xlane.xlu0 %350
    %v352 = vsel %vm342, %v339, -inf
    %353 = vmax.xlane.f32.xlu0 %v352
    %v354 = vpop.xlane.xlu0 %353
    %v355 = vsub.f32 %v267, %v345
    %v356 = vsub.f32 %v291, %v348
    %v357 = vsub.f32 %v315, %v351
    %v358 = vsub.f32 %v339, %v354
    %v359 = vmul.f32 %v355, 1.442695
    %v360 = vpow.pop %v359
    %v361 = vmul.f32 %v356, 1.442695
    %v362 = vpow.pop %v361
    %v363 = vmul.f32 %v357, 1.442695
    %v364 = vpow.pop %v363
    %v365 = vmul.f32 %v358, 1.442695
    %v366 = vpow.pop %v365
    %v367 = vsel %vm342, %v360, 0.0
    %368 = vadd.xlane.f32.xlu0 %v367
    %v369 = vpop.xlane.xlu0 %368
    %v370 = vsel %vm342, %v362, 0.0
    %371 = vadd.xlane.f32.xlu0 %v370
    %v372 = vpop.xlane.xlu0 %371
    %v373 = vsel %vm342, %v364, 0.0
    %374 = vadd.xlane.f32.xlu0 %v373
    %v375 = vpop.xlane.xlu0 %374
    %v376 = vsel %vm342, %v366, 0.0
    %377 = vadd.xlane.f32.xlu0 %v376
    %v378 = vpop.xlane.xlu0 %377
    %v379 = vrcp.pop %v369
    %v380 = vmul.f32 %v369, %v379
    %v381 = vsub.f32 1.0, %v380
    %v382 = vmul.f32 %v379, %v381
    %v383 = vadd.f32 %v379, %v382
    %vm384 = vweird.f32 %v369
    %vm385 = vweird.f32 %v379
    %vm386 = vmor %vm384, %vm385
    %v387 = vsel %vm386, %v379, %v383
    %v388 = vand.u32 2147483647, %v369
    %vm389 = vcmp.eq.f32.partialorder %v388, 8.507059e+37
    %v390 = vand.u32 %v369, 2147483648
    %v391 = vor.u32 1.1754944e-38, %v390
    %v392 = vsel %vm389, %v391, %v387
    %v393 = vrcp.pop %v372
    %v394 = vmul.f32 %v372, %v393
    %v395 = vsub.f32 1.0, %v394
    %v396 = vmul.f32 %v393, %v395
    %v397 = vadd.f32 %v393, %v396
    %vm398 = vweird.f32 %v372
    %vm399 = vweird.f32 %v393
    %vm400 = vmor %vm398, %vm399
    %v401 = vsel %vm400, %v393, %v397
    %v402 = vand.u32 2147483647, %v372
    %vm403 = vcmp.eq.f32.partialorder %v402, 8.507059e+37
    %v404 = vand.u32 %v372, 2147483648
    %v405 = vor.u32 1.1754944e-38, %v404
    %v406 = vsel %vm403, %v405, %v401
    %v407 = vrcp.pop %v375
    %v408 = vmul.f32 %v375, %v407
    %v409 = vsub.f32 1.0, %v408
    %v410 = vmul.f32 %v407, %v409
    %v411 = vadd.f32 %v407, %v410
    %vm412 = vweird.f32 %v375
    %vm413 = vweird.f32 %v407
    %vm414 = vmor %vm412, %vm413
    %v415 = vsel %vm414, %v407, %v411
    %v416 = vand.u32 2147483647, %v375
    %vm417 = vcmp.eq.f32.partialorder %v416, 8.507059e+37
    %v418 = vand.u32 %v375, 2147483648
    %v419 = vor.u32 1.1754944e-38, %v418
    %v420 = vsel %vm417, %v419, %v415
    %v421 = vrcp.pop %v378
    %v422 = vmul.f32 %v378, %v421
    %v423 = vsub.f32 1.0, %v422
    %v424 = vmul.f32 %v421, %v423
    %v425 = vadd.f32 %v421, %v424
    %vm426 = vweird.f32 %v378
    %vm427 = vweird.f32 %v421
    %vm428 = vmor %vm426, %vm427
    %v429 = vsel %vm428, %v421, %v425
    %v430 = vand.u32 2147483647, %v378
    %vm431 = vcmp.eq.f32.partialorder %v430, 8.507059e+37
    %v432 = vand.u32 %v378, 2147483648
    %v433 = vor.u32 1.1754944e-38, %v432
    %v434 = vsel %vm431, %v433, %v429
    %v435 = vmul.f32 %v360, %v392
    %v436 = vmul.f32 %v362, %v406
    %v437 = vmul.f32 %v364, %v420
    %v438 = vmul.f32 %v366, %v434
    %v439 = vadd.f32 %v435, 0.0
    %v440 = vadd.f32 %v436, 0.0
    %v441 = vadd.f32 %v437, 0.0
    %v442 = vadd.f32 %v438, 0.0
    %v443 = vpack.c.bf16 %v435, %v435
    %v444 = vpack.c.bf16 %v436, %v436
    %v445 = vpack.c.bf16 %v437, %v437
    %v446 = vpack.c.bf16 %v438, %v438
    %447 = vrot.lane.b32.xlu0 %v249, 96
    %v448 = vpop.permute.xlu0 %447
    %v451 = vsel %vm342, %v443, 0
    %453 = vmatpush.bf16.msra.mxu0 0
    %454 = vmatpush.bf16.msra.mxu0 0
    %455 = vmatpush.bf16.msra.mxu0 0
    %456 = vmatpush.bf16.msra.mxu0 0
    %457 = vmatpush.bf16.msra.mxu0 0
    %458 = vmatpush.bf16.msra.mxu0 0
    %459 = vmatpush.bf16.msra.mxu0 0
    %460 = vmatpush.bf16.msra.mxu0 %v448
    %461 = vmatmul.bf16.gmra.mxu0 %v451
    %v462 = vpop.f32.mrf.mxu0
    %v463 = vadd.f32 0.0, %v462
    %v464 = vpop.f32.mrf.mxu0
    %465 = vdwg.mxu0
    %466 = vrot.lane.b32.xlu0 %v274, 96
    %v467 = vpop.permute.xlu0 %466
    %v470 = vsel %vm342, %v444, 0
    %472 = vmatpush.bf16.msra.mxu0 0
    %473 = vmatpush.bf16.msra.mxu0 0
    %474 = vmatpush.bf16.msra.mxu0 0
    %475 = vmatpush.bf16.msra.mxu0 0
    %476 = vmatpush.bf16.msra.mxu0 0
    %477 = vmatpush.bf16.msra.mxu0 0
    %478 = vmatpush.bf16.msra.mxu0 0
    %479 = vmatpush.bf16.msra.mxu0 %v467
    %480 = vmatmul.bf16.gmra.mxu0 %v470
    %v481 = vpop.f32.mrf.mxu0
    %v482 = vadd.f32 0.0, %v481
    %v483 = vpop.f32.mrf.mxu0
    %484 = vdwg.mxu0
    %485 = vrot.lane.b32.xlu0 %v298, 96
    %v486 = vpop.permute.xlu0 %485
    %v489 = vsel %vm342, %v445, 0
    %491 = vmatpush.bf16.msra.mxu0 0
    %492 = vmatpush.bf16.msra.mxu0 0
    %493 = vmatpush.bf16.msra.mxu0 0
    %494 = vmatpush.bf16.msra.mxu0 0
    %495 = vmatpush.bf16.msra.mxu0 0
    %496 = vmatpush.bf16.msra.mxu0 0
    %497 = vmatpush.bf16.msra.mxu0 0
    %498 = vmatpush.bf16.msra.mxu0 %v486
    %499 = vmatmul.bf16.gmra.mxu0 %v489
    %v500 = vpop.f32.mrf.mxu0
    %v501 = vadd.f32 0.0, %v500
    %v502 = vpop.f32.mrf.mxu0
    %503 = vdwg.mxu0
    %504 = vrot.lane.b32.xlu0 %v322, 96
    %v505 = vpop.permute.xlu0 %504
    %v508 = vsel %vm342, %v446, 0
    %510 = vmatpush.bf16.msra.mxu0 0
    %511 = vmatpush.bf16.msra.mxu0 0
    %512 = vmatpush.bf16.msra.mxu0 0
    %513 = vmatpush.bf16.msra.mxu0 0
    %514 = vmatpush.bf16.msra.mxu0 0
    %515 = vmatpush.bf16.msra.mxu0 0
    %516 = vmatpush.bf16.msra.mxu0 0
    %517 = vmatpush.bf16.msra.mxu0 %v505
    %518 = vmatmul.bf16.gmra.mxu0 %v508
    %v519 = vpop.f32.mrf.mxu0
    %v520 = vadd.f32 0.0, %v519
    %v521 = vpop.f32.mrf.mxu0
    %522 = vdwg.mxu0
    %v523 = vpack.c.bf16 %v482, %v463
    %v524 = vpack.c.bf16 %v520, %v501
    %v525 = vld [vmem:[#allocation10] sm:$0xf]
    %v527 = vunpack.c.l.b16 %v233
    %v528 = vpack.c.b16 %v527, %v527
    %529 = vrot.lane.b32.xlu0 %v528, 120
    %v530 = vpop.permute.xlu0 %529
    %531 = vrot.lane.b32.xlu0 %v249, 120
    %v532 = vpop.permute.xlu0 %531
    %v534 = vsel %vm250, %v530, 0
    %v537 = vsel %vm250, %v532, 0
    %539 = vmatpush.bf16.xpose.msra.mxu0 0
    %540 = vmatpush.bf16.xpose.msra.mxu0 0
    %541 = vmatpush.bf16.xpose.msra.mxu0 0
    %542 = vmatpush.bf16.xpose.msra.mxu0 0
    %543 = vmatpush.bf16.xpose.msra.mxu0 0
    %544 = vmatpush.bf16.xpose.msra.mxu0 0
    %545 = vmatpush.bf16.xpose.msra.mxu0 0
    %546 = vmatpush.bf16.xpose.msra.mxu0 %v537
    %547 = vmatmul.bf16.gmra.mxu0 %v534
    %v548 = vpop.f32.mrf.mxu0
    %v549 = vadd.f32 0.0, %v548
    %v550 = vpop.f32.mrf.mxu0
    %551 = vdwg.mxu0
    %v553 = vunpack.c.l.b16 %v234
    %v554 = vpack.c.b16 %v553, %v553
    %555 = vrot.lane.b32.xlu0 %v554, 120
    %v556 = vpop.permute.xlu0 %555
    %557 = vrot.lane.b32.xlu0 %v274, 120
    %v558 = vpop.permute.xlu0 %557
    %v560 = vsel %vm250, %v556, 0
    %v563 = vsel %vm250, %v558, 0
    %565 = vmatpush.bf16.xpose.msra.mxu0 0
    %566 = vmatpush.bf16.xpose.msra.mxu0 0
    %567 = vmatpush.bf16.xpose.msra.mxu0 0
    %568 = vmatpush.bf16.xpose.msra.mxu0 0
    %569 = vmatpush.bf16.xpose.msra.mxu0 0
    %570 = vmatpush.bf16.xpose.msra.mxu0 0
    %571 = vmatpush.bf16.xpose.msra.mxu0 0
    %572 = vmatpush.bf16.xpose.msra.mxu0 %v563
    %573 = vmatmul.bf16.gmra.mxu0 %v560
    %v574 = vpop.f32.mrf.mxu0
    %v575 = vadd.f32 0.0, %v574
    %v576 = vpop.f32.mrf.mxu0
    %577 = vdwg.mxu0
    %v579 = vunpack.c.l.b16 %v235
    %v580 = vpack.c.b16 %v579, %v579
    %581 = vrot.lane.b32.xlu0 %v580, 120
    %v582 = vpop.permute.xlu0 %581
    %583 = vrot.lane.b32.xlu0 %v298, 120
    %v584 = vpop.permute.xlu0 %583
    %v586 = vsel %vm250, %v582, 0
    %v589 = vsel %vm250, %v584, 0
    %591 = vmatpush.bf16.xpose.msra.mxu0 0
    %592 = vmatpush.bf16.xpose.msra.mxu0 0
    %593 = vmatpush.bf16.xpose.msra.mxu0 0
    %594 = vmatpush.bf16.xpose.msra.mxu0 0
    %595 = vmatpush.bf16.xpose.msra.mxu0 0
    %596 = vmatpush.bf16.xpose.msra.mxu0 0
    %597 = vmatpush.bf16.xpose.msra.mxu0 0
    %598 = vmatpush.bf16.xpose.msra.mxu0 %v589
    %599 = vmatmul.bf16.gmra.mxu0 %v586
    %v600 = vpop.f32.mrf.mxu0
    %v601 = vadd.f32 0.0, %v600
    %v602 = vpop.f32.mrf.mxu0
    %603 = vdwg.mxu0
    %v605 = vunpack.c.l.b16 %v236
    %v606 = vpack.c.b16 %v605, %v605
    %607 = vrot.lane.b32.xlu0 %v606, 120
    %v608 = vpop.permute.xlu0 %607
    %609 = vrot.lane.b32.xlu0 %v322, 120
    %v610 = vpop.permute.xlu0 %609
    %v612 = vsel %vm250, %v608, 0
    %v615 = vsel %vm250, %v610, 0
    %617 = vmatpush.bf16.xpose.msra.mxu0 0
    %618 = vmatpush.bf16.xpose.msra.mxu0 0
    %619 = vmatpush.bf16.xpose.msra.mxu0 0
    %620 = vmatpush.bf16.xpose.msra.mxu0 0
    %621 = vmatpush.bf16.xpose.msra.mxu0 0
    %622 = vmatpush.bf16.xpose.msra.mxu0 0
    %623 = vmatpush.bf16.xpose.msra.mxu0 0
    %624 = vmatpush.bf16.xpose.msra.mxu0 %v615
    %625 = vmatmul.bf16.gmra.mxu0 %v612
    %v626 = vpop.f32.mrf.mxu0
    %v627 = vadd.f32 0.0, %v626
    %v628 = vpop.f32.mrf.mxu0
    %629 = vdwg.mxu0
    %v630 = vsel %vm342, %v549, -inf
    %631 = vmax.xlane.f32.xlu0 %v630
    %v632 = vpop.xlane.xlu0 %631
    %v633 = vsel %vm342, %v575, -inf
    %634 = vmax.xlane.f32.xlu0 %v633
    %v635 = vpop.xlane.xlu0 %634
    %v636 = vsel %vm342, %v601, -inf
    %637 = vmax.xlane.f32.xlu0 %v636
    %v638 = vpop.xlane.xlu0 %637
    %v639 = vsel %vm342, %v627, -inf
    %640 = vmax.xlane.f32.xlu0 %v639
    %v641 = vpop.xlane.xlu0 %640
    %v642 = vsub.f32 %v549, %v632
    %v643 = vsub.f32 %v575, %v635
    %v644 = vsub.f32 %v601, %v638
    %v645 = vsub.f32 %v627, %v641
    %v646 = vmul.f32 %v642, 1.442695
    %v647 = vpow.pop %v646
    %v648 = vmul.f32 %v643, 1.442695
    %v649 = vpow.pop %v648
    %v650 = vmul.f32 %v644, 1.442695
    %v651 = vpow.pop %v650
    %v652 = vmul.f32 %v645, 1.442695
    %v653 = vpow.pop %v652
    %v654 = vsel %vm342, %v647, 0.0
    %655 = vadd.xlane.f32.xlu0 %v654
    %v656 = vpop.xlane.xlu0 %655
    %v657 = vsel %vm342, %v649, 0.0
    %658 = vadd.xlane.f32.xlu0 %v657
    %v659 = vpop.xlane.xlu0 %658
    %v660 = vsel %vm342, %v651, 0.0
    %661 = vadd.xlane.f32.xlu0 %v660
    %v662 = vpop.xlane.xlu0 %661
    %v663 = vsel %vm342, %v653, 0.0
    %664 = vadd.xlane.f32.xlu0 %v663
    %v665 = vpop.xlane.xlu0 %664
    %v666 = vrcp.pop %v656
    %v667 = vmul.f32 %v656, %v666
    %v668 = vsub.f32 1.0, %v667
    %v669 = vmul.f32 %v666, %v668
    %v670 = vadd.f32 %v666, %v669
    %vm671 = vweird.f32 %v656
    %vm672 = vweird.f32 %v666
    %vm673 = vmor %vm671, %vm672
    %v674 = vsel %vm673, %v666, %v670
    %v675 = vand.u32 2147483647, %v656
    %vm676 = vcmp.eq.f32.partialorder %v675, 8.507059e+37
    %v677 = vand.u32 %v656, 2147483648
    %v678 = vor.u32 1.1754944e-38, %v677
    %v679 = vsel %vm676, %v678, %v674
    %v680 = vrcp.pop %v659
    %v681 = vmul.f32 %v659, %v680
    %v682 = vsub.f32 1.0, %v681
    %v683 = vmul.f32 %v680, %v682
    %v684 = vadd.f32 %v680, %v683
    %vm685 = vweird.f32 %v659
    %vm686 = vweird.f32 %v680
    %vm687 = vmor %vm685, %vm686
    %v688 = vsel %vm687, %v680, %v684
    %v689 = vand.u32 2147483647, %v659
    %vm690 = vcmp.eq.f32.partialorder %v689, 8.507059e+37
    %v691 = vand.u32 %v659, 2147483648
    %v692 = vor.u32 1.1754944e-38, %v691
    %v693 = vsel %vm690, %v692, %v688
    %v694 = vrcp.pop %v662
    %v695 = vmul.f32 %v662, %v694
    %v696 = vsub.f32 1.0, %v695
    %v697 = vmul.f32 %v694, %v696
    %v698 = vadd.f32 %v694, %v697
    %vm699 = vweird.f32 %v662
    %vm700 = vweird.f32 %v694
    %vm701 = vmor %vm699, %vm700
    %v702 = vsel %vm701, %v694, %v698
    %v703 = vand.u32 2147483647, %v662
    %vm704 = vcmp.eq.f32.partialorder %v703, 8.507059e+37
    %v705 = vand.u32 %v662, 2147483648
    %v706 = vor.u32 1.1754944e-38, %v705
    %v707 = vsel %vm704, %v706, %v702
    %v708 = vrcp.pop %v665
    %v709 = vmul.f32 %v665, %v708
    %v710 = vsub.f32 1.0, %v709
    %v711 = vmul.f32 %v708, %v710
    %v712 = vadd.f32 %v708, %v711
    %vm713 = vweird.f32 %v665
    %vm714 = vweird.f32 %v708
    %vm715 = vmor %vm713, %vm714
    %v716 = vsel %vm715, %v708, %v712
    %v717 = vand.u32 2147483647, %v665
    %vm718 = vcmp.eq.f32.partialorder %v717, 8.507059e+37
    %v719 = vand.u32 %v665, 2147483648
    %v720 = vor.u32 1.1754944e-38, %v719
    %v721 = vsel %vm718, %v720, %v716
    %v722 = vmul.f32 %v647, %v679
    %v723 = vmul.f32 %v649, %v693
    %v724 = vmul.f32 %v651, %v707
    %v725 = vmul.f32 %v653, %v721
    %v726 = vadd.f32 %v439, %v722
    %v727 = vadd.f32 %v440, %v723
    %v728 = vadd.f32 %v441, %v724
    %v729 = vadd.f32 %v442, %v725
    %v730 = vpack.c.bf16 %v722, %v722
    %v731 = vpack.c.bf16 %v723, %v723
    %v732 = vpack.c.bf16 %v724, %v724
    %v733 = vpack.c.bf16 %v725, %v725
    %734 = vrot.lane.b32.xlu0 %v249, 88
    %v735 = vpop.permute.xlu0 %734
    %v738 = vsel %vm342, %v730, 0
    %740 = vmatpush.bf16.msra.mxu0 0
    %741 = vmatpush.bf16.msra.mxu0 0
    %742 = vmatpush.bf16.msra.mxu0 0
    %743 = vmatpush.bf16.msra.mxu0 0
    %744 = vmatpush.bf16.msra.mxu0 0
    %745 = vmatpush.bf16.msra.mxu0 0
    %746 = vmatpush.bf16.msra.mxu0 0
    %747 = vmatpush.bf16.msra.mxu0 %v735
    %748 = vmatmul.bf16.gmra.mxu0 %v738
    %v749 = vpop.f32.mrf.mxu0
    %v750 = vadd.f32 0.0, %v749
    %v751 = vpop.f32.mrf.mxu0
    %752 = vdwg.mxu0
    %753 = vrot.lane.b32.xlu0 %v274, 88
    %v754 = vpop.permute.xlu0 %753
    %v757 = vsel %vm342, %v731, 0
    %759 = vmatpush.bf16.msra.mxu0 0
    %760 = vmatpush.bf16.msra.mxu0 0
    %761 = vmatpush.bf16.msra.mxu0 0
    %762 = vmatpush.bf16.msra.mxu0 0
    %763 = vmatpush.bf16.msra.mxu0 0
    %764 = vmatpush.bf16.msra.mxu0 0
    %765 = vmatpush.bf16.msra.mxu0 0
    %766 = vmatpush.bf16.msra.mxu0 %v754
    %767 = vmatmul.bf16.gmra.mxu0 %v757
    %v768 = vpop.f32.mrf.mxu0
    %v769 = vadd.f32 0.0, %v768
    %v770 = vpop.f32.mrf.mxu0
    %771 = vdwg.mxu0
    %772 = vrot.lane.b32.xlu0 %v298, 88
    %v773 = vpop.permute.xlu0 %772
    %v776 = vsel %vm342, %v732, 0
    %778 = vmatpush.bf16.msra.mxu0 0
    %779 = vmatpush.bf16.msra.mxu0 0
    %780 = vmatpush.bf16.msra.mxu0 0
    %781 = vmatpush.bf16.msra.mxu0 0
    %782 = vmatpush.bf16.msra.mxu0 0
    %783 = vmatpush.bf16.msra.mxu0 0
    %784 = vmatpush.bf16.msra.mxu0 0
    %785 = vmatpush.bf16.msra.mxu0 %v773
    %786 = vmatmul.bf16.gmra.mxu0 %v776
    %v787 = vpop.f32.mrf.mxu0
    %v788 = vadd.f32 0.0, %v787
    %v789 = vpop.f32.mrf.mxu0
    %790 = vdwg.mxu0
    %791 = vrot.lane.b32.xlu0 %v322, 88
    %v792 = vpop.permute.xlu0 %791
    %v795 = vsel %vm342, %v733, 0
    %797 = vmatpush.bf16.msra.mxu0 0
    %798 = vmatpush.bf16.msra.mxu0 0
    %799 = vmatpush.bf16.msra.mxu0 0
    %800 = vmatpush.bf16.msra.mxu0 0
    %801 = vmatpush.bf16.msra.mxu0 0
    %802 = vmatpush.bf16.msra.mxu0 0
    %803 = vmatpush.bf16.msra.mxu0 0
    %804 = vmatpush.bf16.msra.mxu0 %v792
    %805 = vmatmul.bf16.gmra.mxu0 %v795
    %v806 = vpop.f32.mrf.mxu0
    %v807 = vadd.f32 0.0, %v806
    %v808 = vpop.f32.mrf.mxu0
    %809 = vdwg.mxu0
    %v810 = vpack.c.bf16 %v769, %v750
    %v811 = vpack.c.bf16 %v807, %v788
    %v812 = vld [vmem:[#allocation10 + $0x4] sm:$0xf]
    %v814 = vsel %vm250, %v810, 0
    %v817 = vsel %vm250, %v811, 0
    %v820 = vsel %vm200, %v812, 0
    %822 = vmatpush.bf16.msra.mxu0 0
    %823 = vmatpush.bf16.msra.mxu0 0
    %824 = vmatpush.bf16.msra.mxu0 0
    %825 = vmatpush.bf16.msra.mxu0 0
    %826 = vmatpush.bf16.msra.mxu0 0
    %827 = vmatpush.bf16.msra.mxu0 0
    %828 = vmatpush.bf16.msra.mxu0 0
    %829 = vmatpush.bf16.msra.mxu0 %v820
    %830 = vmatmul.bf16.gmra.mxu0 %v814
    %v831 = vpop.f32.mrf.mxu0
    %v832 = vadd.f32 0.0, %v831
    %v833 = vpop.f32.mrf.mxu0
    %v834 = vadd.f32 0.0, %v833
    %835 = vmatmul.bf16.gmra.mxu0 %v817
    %v836 = vpop.f32.mrf.mxu0
    %v837 = vadd.f32 0.0, %v836
    %v838 = vpop.f32.mrf.mxu0
    %v839 = vadd.f32 0.0, %v838
    %840 = vdwg.mxu0
    %v842 = vsel %vm250, %v523, 0
    %v845 = vsel %vm250, %v524, 0
    %v848 = vsel %vm200, %v525, 0
    %850 = vmatpush.bf16.msra.mxu0 0
    %851 = vmatpush.bf16.msra.mxu0 0
    %852 = vmatpush.bf16.msra.mxu0 0
    %853 = vmatpush.bf16.msra.mxu0 0
    %854 = vmatpush.bf16.msra.mxu0 0
    %855 = vmatpush.bf16.msra.mxu0 0
    %856 = vmatpush.bf16.msra.mxu0 0
    %857 = vmatpush.bf16.msra.mxu0 %v848
    %858 = vmatmul.bf16.gmra.mxu0 %v842
    %v859 = vpop.f32.mrf.mxu0
    %v860 = vadd.f32 %v832, %v859
    %v861 = vpop.f32.mrf.mxu0
    %v862 = vadd.f32 %v834, %v861
    %863 = vmatmul.bf16.gmra.mxu0 %v845
    %v864 = vpop.f32.mrf.mxu0
    %v865 = vadd.f32 %v837, %v864
    %v866 = vpop.f32.mrf.mxu0
    %v867 = vadd.f32 %v839, %v866
    %868 = vdwg.mxu0
    %869 = vrot.lane.b32.xlu0 %v528, 112
    %v870 = vpop.permute.xlu0 %869
    %871 = vrot.lane.b32.xlu0 %v249, 112
    %v872 = vpop.permute.xlu0 %871
    %v874 = vsel %vm250, %v870, 0
    %v877 = vsel %vm250, %v872, 0
    %879 = vmatpush.bf16.xpose.msra.mxu0 0
    %880 = vmatpush.bf16.xpose.msra.mxu0 0
    %881 = vmatpush.bf16.xpose.msra.mxu0 0
    %882 = vmatpush.bf16.xpose.msra.mxu0 0
    %883 = vmatpush.bf16.xpose.msra.mxu0 0
    %884 = vmatpush.bf16.xpose.msra.mxu0 0
    %885 = vmatpush.bf16.xpose.msra.mxu0 0
    %886 = vmatpush.bf16.xpose.msra.mxu0 %v877
    %887 = vmatmul.bf16.gmra.mxu0 %v874
    %v888 = vpop.f32.mrf.mxu0
    %v889 = vadd.f32 0.0, %v888
    %v890 = vpop.f32.mrf.mxu0
    %891 = vdwg.mxu0
    %892 = vrot.lane.b32.xlu0 %v554, 112
    %v893 = vpop.permute.xlu0 %892
    %894 = vrot.lane.b32.xlu0 %v274, 112
    %v895 = vpop.permute.xlu0 %894
    %v897 = vsel %vm250, %v893, 0
    %v900 = vsel %vm250, %v895, 0
    %902 = vmatpush.bf16.xpose.msra.mxu0 0
    %903 = vmatpush.bf16.xpose.msra.mxu0 0
    %904 = vmatpush.bf16.xpose.msra.mxu0 0
    %905 = vmatpush.bf16.xpose.msra.mxu0 0
    %906 = vmatpush.bf16.xpose.msra.mxu0 0
    %907 = vmatpush.bf16.xpose.msra.mxu0 0
    %908 = vmatpush.bf16.xpose.msra.mxu0 0
    %909 = vmatpush.bf16.xpose.msra.mxu0 %v900
    %910 = vmatmul.bf16.gmra.mxu0 %v897
    %v911 = vpop.f32.mrf.mxu0
    %v912 = vadd.f32 0.0, %v911
    %v913 = vpop.f32.mrf.mxu0
    %914 = vdwg.mxu0
    %915 = vrot.lane.b32.xlu0 %v580, 112
    %v916 = vpop.permute.xlu0 %915
    %917 = vrot.lane.b32.xlu0 %v298, 112
    %v918 = vpop.permute.xlu0 %917
    %v920 = vsel %vm250, %v916, 0
    %v923 = vsel %vm250, %v918, 0
    %925 = vmatpush.bf16.xpose.msra.mxu0 0
    %926 = vmatpush.bf16.xpose.msra.mxu0 0
    %927 = vmatpush.bf16.xpose.msra.mxu0 0
    %928 = vmatpush.bf16.xpose.msra.mxu0 0
    %929 = vmatpush.bf16.xpose.msra.mxu0 0
    %930 = vmatpush.bf16.xpose.msra.mxu0 0
    %931 = vmatpush.bf16.xpose.msra.mxu0 0
    %932 = vmatpush.bf16.xpose.msra.mxu0 %v923
    %933 = vmatmul.bf16.gmra.mxu0 %v920
    %v934 = vpop.f32.mrf.mxu0
    %v935 = vadd.f32 0.0, %v934
    %v936 = vpop.f32.mrf.mxu0
    %937 = vdwg.mxu0
    %938 = vrot.lane.b32.xlu0 %v606, 112
    %v939 = vpop.permute.xlu0 %938
    %940 = vrot.lane.b32.xlu0 %v322, 112
    %v941 = vpop.permute.xlu0 %940
    %v943 = vsel %vm250, %v939, 0
    %v946 = vsel %vm250, %v941, 0
    %948 = vmatpush.bf16.xpose.msra.mxu0 0
    %949 = vmatpush.bf16.xpose.msra.mxu0 0
    %950 = vmatpush.bf16.xpose.msra.mxu0 0
    %951 = vmatpush.bf16.xpose.msra.mxu0 0
    %952 = vmatpush.bf16.xpose.msra.mxu0 0
    %953 = vmatpush.bf16.xpose.msra.mxu0 0
    %954 = vmatpush.bf16.xpose.msra.mxu0 0
    %955 = vmatpush.bf16.xpose.msra.mxu0 %v946
    %956 = vmatmul.bf16.gmra.mxu0 %v943
    %v957 = vpop.f32.mrf.mxu0
    %v958 = vadd.f32 0.0, %v957
    %v959 = vpop.f32.mrf.mxu0
    %960 = vdwg.mxu0
    %v961 = vsel %vm342, %v889, -inf
    %962 = vmax.xlane.f32.xlu0 %v961
    %v963 = vpop.xlane.xlu0 %962
    %v964 = vsel %vm342, %v912, -inf
    %965 = vmax.xlane.f32.xlu0 %v964
    %v966 = vpop.xlane.xlu0 %965
    %v967 = vsel %vm342, %v935, -inf
    %968 = vmax.xlane.f32.xlu0 %v967
    %v969 = vpop.xlane.xlu0 %968
    %v970 = vsel %vm342, %v958, -inf
    %971 = vmax.xlane.f32.xlu0 %v970
    %v972 = vpop.xlane.xlu0 %971
    %v973 = vsub.f32 %v889, %v963
    %v974 = vsub.f32 %v912, %v966
    %v975 = vsub.f32 %v935, %v969
    %v976 = vsub.f32 %v958, %v972
    %v977 = vmul.f32 %v973, 1.442695
    %v978 = vpow.pop %v977
    %v979 = vmul.f32 %v974, 1.442695
    %v980 = vpow.pop %v979
    %v981 = vmul.f32 %v975, 1.442695
    %v982 = vpow.pop %v981
    %v983 = vmul.f32 %v976, 1.442695
    %v984 = vpow.pop %v983
    %v985 = vsel %vm342, %v978, 0.0
    %986 = vadd.xlane.f32.xlu0 %v985
    %v987 = vpop.xlane.xlu0 %986
    %v988 = vsel %vm342, %v980, 0.0
    %989 = vadd.xlane.f32.xlu0 %v988
    %v990 = vpop.xlane.xlu0 %989
    %v991 = vsel %vm342, %v982, 0.0
    %992 = vadd.xlane.f32.xlu0 %v991
    %v993 = vpop.xlane.xlu0 %992
    %v994 = vsel %vm342, %v984, 0.0
    %995 = vadd.xlane.f32.xlu0 %v994
    %v996 = vpop.xlane.xlu0 %995
    %v997 = vrcp.pop %v987
    %v998 = vmul.f32 %v987, %v997
    %v999 = vsub.f32 1.0, %v998
    %v1000 = vmul.f32 %v997, %v999
    %v1001 = vadd.f32 %v997, %v1000
    %vm1002 = vweird.f32 %v987
    %vm1003 = vweird.f32 %v997
    %vm1004 = vmor %vm1002, %vm1003
    %v1005 = vsel %vm1004, %v997, %v1001
    %v1006 = vand.u32 2147483647, %v987
    %vm1007 = vcmp.eq.f32.partialorder %v1006, 8.507059e+37
    %v1008 = vand.u32 %v987, 2147483648
    %v1009 = vor.u32 1.1754944e-38, %v1008
    %v1010 = vsel %vm1007, %v1009, %v1005
    %v1011 = vrcp.pop %v990
    %v1012 = vmul.f32 %v990, %v1011
    %v1013 = vsub.f32 1.0, %v1012
    %v1014 = vmul.f32 %v1011, %v1013
    %v1015 = vadd.f32 %v1011, %v1014
    %vm1016 = vweird.f32 %v990
    %vm1017 = vweird.f32 %v1011
    %vm1018 = vmor %vm1016, %vm1017
    %v1019 = vsel %vm1018, %v1011, %v1015
    %v1020 = vand.u32 2147483647, %v990
    %vm1021 = vcmp.eq.f32.partialorder %v1020, 8.507059e+37
    %v1022 = vand.u32 %v990, 2147483648
    %v1023 = vor.u32 1.1754944e-38, %v1022
    %v1024 = vsel %vm1021, %v1023, %v1019
    %v1025 = vrcp.pop %v993
    %v1026 = vmul.f32 %v993, %v1025
    %v1027 = vsub.f32 1.0, %v1026
    %v1028 = vmul.f32 %v1025, %v1027
    %v1029 = vadd.f32 %v1025, %v1028
    %vm1030 = vweird.f32 %v993
    %vm1031 = vweird.f32 %v1025
    %vm1032 = vmor %vm1030, %vm1031
    %v1033 = vsel %vm1032, %v1025, %v1029
    %v1034 = vand.u32 2147483647, %v993
    %vm1035 = vcmp.eq.f32.partialorder %v1034, 8.507059e+37
    %v1036 = vand.u32 %v993, 2147483648
    %v1037 = vor.u32 1.1754944e-38, %v1036
    %v1038 = vsel %vm1035, %v1037, %v1033
    %v1039 = vrcp.pop %v996
    %v1040 = vmul.f32 %v996, %v1039
    %v1041 = vsub.f32 1.0, %v1040
    %v1042 = vmul.f32 %v1039, %v1041
    %v1043 = vadd.f32 %v1039, %v1042
    %vm1044 = vweird.f32 %v996
    %vm1045 = vweird.f32 %v1039
    %vm1046 = vmor %vm1044, %vm1045
    %v1047 = vsel %vm1046, %v1039, %v1043
    %v1048 = vand.u32 2147483647, %v996
    %vm1049 = vcmp.eq.f32.partialorder %v1048, 8.507059e+37
    %v1050 = vand.u32 %v996, 2147483648
    %v1051 = vor.u32 1.1754944e-38, %v1050
    %v1052 = vsel %vm1049, %v1051, %v1047
    %v1053 = vmul.f32 %v978, %v1010
    %v1054 = vmul.f32 %v980, %v1024
    %v1055 = vmul.f32 %v982, %v1038
    %v1056 = vmul.f32 %v984, %v1052
    %v1057 = vadd.f32 %v726, %v1053
    %v1058 = vadd.f32 %v727, %v1054
    %v1059 = vadd.f32 %v728, %v1055
    %v1060 = vadd.f32 %v729, %v1056
    %v1061 = vpack.c.bf16 %v1053, %v1053
    %v1062 = vpack.c.bf16 %v1054, %v1054
    %v1063 = vpack.c.bf16 %v1055, %v1055
    %v1064 = vpack.c.bf16 %v1056, %v1056
    %1065 = vrot.lane.b32.xlu0 %v249, 80
    %v1066 = vpop.permute.xlu0 %1065
    %v1069 = vsel %vm342, %v1061, 0
    %1071 = vmatpush.bf16.msra.mxu0 0
    %1072 = vmatpush.bf16.msra.mxu0 0
    %1073 = vmatpush.bf16.msra.mxu0 0
    %1074 = vmatpush.bf16.msra.mxu0 0
    %1075 = vmatpush.bf16.msra.mxu0 0
    %1076 = vmatpush.bf16.msra.mxu0 0
    %1077 = vmatpush.bf16.msra.mxu0 0
    %1078 = vmatpush.bf16.msra.mxu0 %v1066
    %1079 = vmatmul.bf16.gmra.mxu0 %v1069
    %v1080 = vpop.f32.mrf.mxu0
    %v1081 = vadd.f32 0.0, %v1080
    %v1082 = vpop.f32.mrf.mxu0
    %1083 = vdwg.mxu0
    %1084 = vrot.lane.b32.xlu0 %v274, 80
    %v1085 = vpop.permute.xlu0 %1084
    %v1088 = vsel %vm342, %v1062, 0
    %1090 = vmatpush.bf16.msra.mxu0 0
    %1091 = vmatpush.bf16.msra.mxu0 0
    %1092 = vmatpush.bf16.msra.mxu0 0
    %1093 = vmatpush.bf16.msra.mxu0 0
    %1094 = vmatpush.bf16.msra.mxu0 0
    %1095 = vmatpush.bf16.msra.mxu0 0
    %1096 = vmatpush.bf16.msra.mxu0 0
    %1097 = vmatpush.bf16.msra.mxu0 %v1085
    %1098 = vmatmul.bf16.gmra.mxu0 %v1088
    %v1099 = vpop.f32.mrf.mxu0
    %v1100 = vadd.f32 0.0, %v1099
    %v1101 = vpop.f32.mrf.mxu0
    %1102 = vdwg.mxu0
    %1103 = vrot.lane.b32.xlu0 %v298, 80
    %v1104 = vpop.permute.xlu0 %1103
    %v1107 = vsel %vm342, %v1063, 0
    %1109 = vmatpush.bf16.msra.mxu0 0
    %1110 = vmatpush.bf16.msra.mxu0 0
    %1111 = vmatpush.bf16.msra.mxu0 0
    %1112 = vmatpush.bf16.msra.mxu0 0
    %1113 = vmatpush.bf16.msra.mxu0 0
    %1114 = vmatpush.bf16.msra.mxu0 0
    %1115 = vmatpush.bf16.msra.mxu0 0
    %1116 = vmatpush.bf16.msra.mxu0 %v1104
    %1117 = vmatmul.bf16.gmra.mxu0 %v1107
    %v1118 = vpop.f32.mrf.mxu0
    %v1119 = vadd.f32 0.0, %v1118
    %v1120 = vpop.f32.mrf.mxu0
    %1121 = vdwg.mxu0
    %1122 = vrot.lane.b32.xlu0 %v322, 80
    %v1123 = vpop.permute.xlu0 %1122
    %v1126 = vsel %vm342, %v1064, 0
    %1128 = vmatpush.bf16.msra.mxu0 0
    %1129 = vmatpush.bf16.msra.mxu0 0
    %1130 = vmatpush.bf16.msra.mxu0 0
    %1131 = vmatpush.bf16.msra.mxu0 0
    %1132 = vmatpush.bf16.msra.mxu0 0
    %1133 = vmatpush.bf16.msra.mxu0 0
    %1134 = vmatpush.bf16.msra.mxu0 0
    %1135 = vmatpush.bf16.msra.mxu0 %v1123
    %1136 = vmatmul.bf16.gmra.mxu0 %v1126
    %v1137 = vpop.f32.mrf.mxu0
    %v1138 = vadd.f32 0.0, %v1137
    %v1139 = vpop.f32.mrf.mxu0
    %1140 = vdwg.mxu0
    %v1141 = vpack.c.bf16 %v1100, %v1081
    %v1142 = vpack.c.bf16 %v1138, %v1119
    %v1143 = vld [vmem:[#allocation10 + $0x8] sm:$0xf]
    %v1145 = vsel %vm250, %v1141, 0
    %v1148 = vsel %vm250, %v1142, 0
    %v1151 = vsel %vm200, %v1143, 0
    %1153 = vmatpush.bf16.msra.mxu0 0
    %1154 = vmatpush.bf16.msra.mxu0 0
    %1155 = vmatpush.bf16.msra.mxu0 0
    %1156 = vmatpush.bf16.msra.mxu0 0
    %1157 = vmatpush.bf16.msra.mxu0 0
    %1158 = vmatpush.bf16.msra.mxu0 0
    %1159 = vmatpush.bf16.msra.mxu0 0
    %1160 = vmatpush.bf16.msra.mxu0 %v1151
    %1161 = vmatmul.bf16.gmra.mxu0 %v1145
    %v1162 = vpop.f32.mrf.mxu0
    %v1163 = vadd.f32 0.0, %v1162
    %v1164 = vpop.f32.mrf.mxu0
    %v1165 = vadd.f32 0.0, %v1164
    %1166 = vmatmul.bf16.gmra.mxu0 %v1148
    %v1167 = vpop.f32.mrf.mxu0
    %v1168 = vadd.f32 0.0, %v1167
    %v1169 = vpop.f32.mrf.mxu0
    %v1170 = vadd.f32 0.0, %v1169
    %1171 = vdwg.mxu0
    %v1172 = vadd.f32 %v860, %v1163
    %v1173 = vadd.f32 %v862, %v1165
    %v1174 = vadd.f32 %v865, %v1168
    %v1175 = vadd.f32 %v867, %v1170
    %1176 = vrot.lane.b32.xlu0 %v528, 104
    %v1177 = vpop.permute.xlu0 %1176
    %1178 = vrot.lane.b32.xlu0 %v249, 104
    %v1179 = vpop.permute.xlu0 %1178
    %v1181 = vsel %vm250, %v1177, 0
    %v1184 = vsel %vm250, %v1179, 0
    %1186 = vmatpush.bf16.xpose.msra.mxu0 0
    %1187 = vmatpush.bf16.xpose.msra.mxu0 0
    %1188 = vmatpush.bf16.xpose.msra.mxu0 0
    %1189 = vmatpush.bf16.xpose.msra.mxu0 0
    %1190 = vmatpush.bf16.xpose.msra.mxu0 0
    %1191 = vmatpush.bf16.xpose.msra.mxu0 0
    %1192 = vmatpush.bf16.xpose.msra.mxu0 0
    %1193 = vmatpush.bf16.xpose.msra.mxu0 %v1184
    %1194 = vmatmul.bf16.gmra.mxu0 %v1181
    %v1195 = vpop.f32.mrf.mxu0
    %v1196 = vadd.f32 0.0, %v1195
    %v1197 = vpop.f32.mrf.mxu0
    %1198 = vdwg.mxu0
    %1199 = vrot.lane.b32.xlu0 %v554, 104
    %v1200 = vpop.permute.xlu0 %1199
    %1201 = vrot.lane.b32.xlu0 %v274, 104
    %v1202 = vpop.permute.xlu0 %1201
    %v1204 = vsel %vm250, %v1200, 0
    %v1207 = vsel %vm250, %v1202, 0
    %1209 = vmatpush.bf16.xpose.msra.mxu0 0
    %1210 = vmatpush.bf16.xpose.msra.mxu0 0
    %1211 = vmatpush.bf16.xpose.msra.mxu0 0
    %1212 = vmatpush.bf16.xpose.msra.mxu0 0
    %1213 = vmatpush.bf16.xpose.msra.mxu0 0
    %1214 = vmatpush.bf16.xpose.msra.mxu0 0
    %1215 = vmatpush.bf16.xpose.msra.mxu0 0
    %1216 = vmatpush.bf16.xpose.msra.mxu0 %v1207
    %1217 = vmatmul.bf16.gmra.mxu0 %v1204
    %v1218 = vpop.f32.mrf.mxu0
    %v1219 = vadd.f32 0.0, %v1218
    %v1220 = vpop.f32.mrf.mxu0
    %1221 = vdwg.mxu0
    %1222 = vrot.lane.b32.xlu0 %v580, 104
    %v1223 = vpop.permute.xlu0 %1222
    %1224 = vrot.lane.b32.xlu0 %v298, 104
    %v1225 = vpop.permute.xlu0 %1224
    %v1227 = vsel %vm250, %v1223, 0
    %v1230 = vsel %vm250, %v1225, 0
    %1232 = vmatpush.bf16.xpose.msra.mxu0 0
    %1233 = vmatpush.bf16.xpose.msra.mxu0 0
    %1234 = vmatpush.bf16.xpose.msra.mxu0 0
    %1235 = vmatpush.bf16.xpose.msra.mxu0 0
    %1236 = vmatpush.bf16.xpose.msra.mxu0 0
    %1237 = vmatpush.bf16.xpose.msra.mxu0 0
    %1238 = vmatpush.bf16.xpose.msra.mxu0 0
    %1239 = vmatpush.bf16.xpose.msra.mxu0 %v1230
    %1240 = vmatmul.bf16.gmra.mxu0 %v1227
    %v1241 = vpop.f32.mrf.mxu0
    %v1242 = vadd.f32 0.0, %v1241
    %v1243 = vpop.f32.mrf.mxu0
    %1244 = vdwg.mxu0
    %1245 = vrot.lane.b32.xlu0 %v606, 104
    %v1246 = vpop.permute.xlu0 %1245
    %1247 = vrot.lane.b32.xlu0 %v322, 104
    %v1248 = vpop.permute.xlu0 %1247
    %v1250 = vsel %vm250, %v1246, 0
    %v1253 = vsel %vm250, %v1248, 0
    %1255 = vmatpush.bf16.xpose.msra.mxu0 0
    %1256 = vmatpush.bf16.xpose.msra.mxu0 0
    %1257 = vmatpush.bf16.xpose.msra.mxu0 0
    %1258 = vmatpush.bf16.xpose.msra.mxu0 0
    %1259 = vmatpush.bf16.xpose.msra.mxu0 0
    %1260 = vmatpush.bf16.xpose.msra.mxu0 0
    %1261 = vmatpush.bf16.xpose.msra.mxu0 0
    %1262 = vmatpush.bf16.xpose.msra.mxu0 %v1253
    %1263 = vmatmul.bf16.gmra.mxu0 %v1250
    %v1264 = vpop.f32.mrf.mxu0
    %v1265 = vadd.f32 0.0, %v1264
    %v1266 = vpop.f32.mrf.mxu0
    %1267 = vdwg.mxu0
    %v1268 = vsel %vm342, %v1196, -inf
    %1269 = vmax.xlane.f32.xlu0 %v1268
    %v1270 = vpop.xlane.xlu0 %1269
    %v1271 = vsel %vm342, %v1219, -inf
    %1272 = vmax.xlane.f32.xlu0 %v1271
    %v1273 = vpop.xlane.xlu0 %1272
    %v1274 = vsel %vm342, %v1242, -inf
    %1275 = vmax.xlane.f32.xlu0 %v1274
    %v1276 = vpop.xlane.xlu0 %1275
    %v1277 = vsel %vm342, %v1265, -inf
    %1278 = vmax.xlane.f32.xlu0 %v1277
    %v1279 = vpop.xlane.xlu0 %1278
    %v1280 = vsub.f32 %v1196, %v1270
    %v1281 = vsub.f32 %v1219, %v1273
    %v1282 = vsub.f32 %v1242, %v1276
    %v1283 = vsub.f32 %v1265, %v1279
    %v1284 = vmul.f32 %v1280, 1.442695
    %v1285 = vpow.pop %v1284
    %v1286 = vmul.f32 %v1281, 1.442695
    %v1287 = vpow.pop %v1286
    %v1288 = vmul.f32 %v1282, 1.442695
    %v1289 = vpow.pop %v1288
    %v1290 = vmul.f32 %v1283, 1.442695
    %v1291 = vpow.pop %v1290
    %v1292 = vsel %vm342, %v1285, 0.0
    %1293 = vadd.xlane.f32.xlu0 %v1292
    %v1294 = vpop.xlane.xlu0 %1293
    %v1295 = vsel %vm342, %v1287, 0.0
    %1296 = vadd.xlane.f32.xlu0 %v1295
    %v1297 = vpop.xlane.xlu0 %1296
    %v1298 = vsel %vm342, %v1289, 0.0
    %1299 = vadd.xlane.f32.xlu0 %v1298
    %v1300 = vpop.xlane.xlu0 %1299
    %v1301 = vsel %vm342, %v1291, 0.0
    %1302 = vadd.xlane.f32.xlu0 %v1301
    %v1303 = vpop.xlane.xlu0 %1302
    %v1304 = vrcp.pop %v1294
    %v1305 = vmul.f32 %v1294, %v1304
    %v1306 = vsub.f32 1.0, %v1305
    %v1307 = vmul.f32 %v1304, %v1306
    %v1308 = vadd.f32 %v1304, %v1307
    %vm1309 = vweird.f32 %v1294
    %vm1310 = vweird.f32 %v1304
    %vm1311 = vmor %vm1309, %vm1310
    %v1312 = vsel %vm1311, %v1304, %v1308
    %v1313 = vand.u32 2147483647, %v1294
    %vm1314 = vcmp.eq.f32.partialorder %v1313, 8.507059e+37
    %v1315 = vand.u32 %v1294, 2147483648
    %v1316 = vor.u32 1.1754944e-38, %v1315
    %v1317 = vsel %vm1314, %v1316, %v1312
    %v1318 = vrcp.pop %v1297
    %v1319 = vmul.f32 %v1297, %v1318
    %v1320 = vsub.f32 1.0, %v1319
    %v1321 = vmul.f32 %v1318, %v1320
    %v1322 = vadd.f32 %v1318, %v1321
    %vm1323 = vweird.f32 %v1297
    %vm1324 = vweird.f32 %v1318
    %vm1325 = vmor %vm1323, %vm1324
    %v1326 = vsel %vm1325, %v1318, %v1322
    %v1327 = vand.u32 2147483647, %v1297
    %vm1328 = vcmp.eq.f32.partialorder %v1327, 8.507059e+37
    %v1329 = vand.u32 %v1297, 2147483648
    %v1330 = vor.u32 1.1754944e-38, %v1329
    %v1331 = vsel %vm1328, %v1330, %v1326
    %v1332 = vrcp.pop %v1300
    %v1333 = vmul.f32 %v1300, %v1332
    %v1334 = vsub.f32 1.0, %v1333
    %v1335 = vmul.f32 %v1332, %v1334
    %v1336 = vadd.f32 %v1332, %v1335
    %vm1337 = vweird.f32 %v1300
    %vm1338 = vweird.f32 %v1332
    %vm1339 = vmor %vm1337, %vm1338
    %v1340 = vsel %vm1339, %v1332, %v1336
    %v1341 = vand.u32 2147483647, %v1300
    %vm1342 = vcmp.eq.f32.partialorder %v1341, 8.507059e+37
    %v1343 = vand.u32 %v1300, 2147483648
    %v1344 = vor.u32 1.1754944e-38, %v1343
    %v1345 = vsel %vm1342, %v1344, %v1340
    %v1346 = vrcp.pop %v1303
    %v1347 = vmul.f32 %v1303, %v1346
    %v1348 = vsub.f32 1.0, %v1347
    %v1349 = vmul.f32 %v1346, %v1348
    %v1350 = vadd.f32 %v1346, %v1349
    %vm1351 = vweird.f32 %v1303
    %vm1352 = vweird.f32 %v1346
    %vm1353 = vmor %vm1351, %vm1352
    %v1354 = vsel %vm1353, %v1346, %v1350
    %v1355 = vand.u32 2147483647, %v1303
    %vm1356 = vcmp.eq.f32.partialorder %v1355, 8.507059e+37
    %v1357 = vand.u32 %v1303, 2147483648
    %v1358 = vor.u32 1.1754944e-38, %v1357
    %v1359 = vsel %vm1356, %v1358, %v1354
    %v1360 = vmul.f32 %v1285, %v1317
    %v1361 = vmul.f32 %v1287, %v1331
    %v1362 = vmul.f32 %v1289, %v1345
    %v1363 = vmul.f32 %v1291, %v1359
    %v1364 = vadd.f32 %v1057, %v1360
    %v1365 = vadd.f32 %v1058, %v1361
    %v1366 = vadd.f32 %v1059, %v1362
    %v1367 = vadd.f32 %v1060, %v1363
    %v1368 = vpack.c.bf16 %v1360, %v1360
    %v1369 = vpack.c.bf16 %v1361, %v1361
    %v1370 = vpack.c.bf16 %v1362, %v1362
    %v1371 = vpack.c.bf16 %v1363, %v1363
    %1372 = vrot.lane.b32.xlu0 %v249, 72
    %v1373 = vpop.permute.xlu0 %1372
    %v1376 = vsel %vm342, %v1368, 0
    %1378 = vmatpush.bf16.msra.mxu0 0
    %1379 = vmatpush.bf16.msra.mxu0 0
    %1380 = vmatpush.bf16.msra.mxu0 0
    %1381 = vmatpush.bf16.msra.mxu0 0
    %1382 = vmatpush.bf16.msra.mxu0 0
    %1383 = vmatpush.bf16.msra.mxu0 0
    %1384 = vmatpush.bf16.msra.mxu0 0
    %1385 = vmatpush.bf16.msra.mxu0 %v1373
    %1386 = vmatmul.bf16.gmra.mxu0 %v1376
    %v1387 = vpop.f32.mrf.mxu0
    %v1388 = vadd.f32 0.0, %v1387
    %v1389 = vpop.f32.mrf.mxu0
    %1390 = vdwg.mxu0
    %1391 = vrot.lane.b32.xlu0 %v274, 72
    %v1392 = vpop.permute.xlu0 %1391
    %v1395 = vsel %vm342, %v1369, 0
    %1397 = vmatpush.bf16.msra.mxu0 0
    %1398 = vmatpush.bf16.msra.mxu0 0
    %1399 = vmatpush.bf16.msra.mxu0 0
    %1400 = vmatpush.bf16.msra.mxu0 0
    %1401 = vmatpush.bf16.msra.mxu0 0
    %1402 = vmatpush.bf16.msra.mxu0 0
    %1403 = vmatpush.bf16.msra.mxu0 0
    %1404 = vmatpush.bf16.msra.mxu0 %v1392
    %1405 = vmatmul.bf16.gmra.mxu0 %v1395
    %v1406 = vpop.f32.mrf.mxu0
    %v1407 = vadd.f32 0.0, %v1406
    %v1408 = vpop.f32.mrf.mxu0
    %1409 = vdwg.mxu0
    %1410 = vrot.lane.b32.xlu0 %v298, 72
    %v1411 = vpop.permute.xlu0 %1410
    %v1414 = vsel %vm342, %v1370, 0
    %1416 = vmatpush.bf16.msra.mxu0 0
    %1417 = vmatpush.bf16.msra.mxu0 0
    %1418 = vmatpush.bf16.msra.mxu0 0
    %1419 = vmatpush.bf16.msra.mxu0 0
    %1420 = vmatpush.bf16.msra.mxu0 0
    %1421 = vmatpush.bf16.msra.mxu0 0
    %1422 = vmatpush.bf16.msra.mxu0 0
    %1423 = vmatpush.bf16.msra.mxu0 %v1411
    %1424 = vmatmul.bf16.gmra.mxu0 %v1414
    %v1425 = vpop.f32.mrf.mxu0
    %v1426 = vadd.f32 0.0, %v1425
    %v1427 = vpop.f32.mrf.mxu0
    %1428 = vdwg.mxu0
    %1429 = vrot.lane.b32.xlu0 %v322, 72
    %v1430 = vpop.permute.xlu0 %1429
    %v1433 = vsel %vm342, %v1371, 0
    %1435 = vmatpush.bf16.msra.mxu0 0
    %1436 = vmatpush.bf16.msra.mxu0 0
    %1437 = vmatpush.bf16.msra.mxu0 0
    %1438 = vmatpush.bf16.msra.mxu0 0
    %1439 = vmatpush.bf16.msra.mxu0 0
    %1440 = vmatpush.bf16.msra.mxu0 0
    %1441 = vmatpush.bf16.msra.mxu0 0
    %1442 = vmatpush.bf16.msra.mxu0 %v1430
    %1443 = vmatmul.bf16.gmra.mxu0 %v1433
    %v1444 = vpop.f32.mrf.mxu0
    %v1445 = vadd.f32 0.0, %v1444
    %v1446 = vpop.f32.mrf.mxu0
    %1447 = vdwg.mxu0
    %v1448 = vpack.c.bf16 %v1407, %v1388
    %v1449 = vpack.c.bf16 %v1445, %v1426
    %v1450 = vld [vmem:[#allocation10 + $0xc] sm:$0xf]
    %v1452 = vsel %vm250, %v1448, 0
    %v1455 = vsel %vm250, %v1449, 0
    %v1458 = vsel %vm200, %v1450, 0
    %1460 = vmatpush.bf16.msra.mxu0 0
    %1461 = vmatpush.bf16.msra.mxu0 0
    %1462 = vmatpush.bf16.msra.mxu0 0
    %1463 = vmatpush.bf16.msra.mxu0 0
    %1464 = vmatpush.bf16.msra.mxu0 0
    %1465 = vmatpush.bf16.msra.mxu0 0
    %1466 = vmatpush.bf16.msra.mxu0 0
    %1467 = vmatpush.bf16.msra.mxu0 %v1458
    %1468 = vmatmul.bf16.gmra.mxu0 %v1452
    %v1469 = vpop.f32.mrf.mxu0
    %v1470 = vadd.f32 0.0, %v1469
    %v1471 = vpop.f32.mrf.mxu0
    %v1472 = vadd.f32 0.0, %v1471
    %1473 = vmatmul.bf16.gmra.mxu0 %v1455
    %v1474 = vpop.f32.mrf.mxu0
    %v1475 = vadd.f32 0.0, %v1474
    %v1476 = vpop.f32.mrf.mxu0
    %v1477 = vadd.f32 0.0, %v1476
    %1478 = vdwg.mxu0
    %v1479 = vadd.f32 %v1172, %v1470
    %v1480 = vadd.f32 %v1173, %v1472
    %v1481 = vadd.f32 %v1174, %v1475
    %v1482 = vadd.f32 %v1175, %v1477
    %v1483 = vld [vmem:[%s7] sm:$0x1]
    %v1485 = vperm.slane %v1483, 0
    %v1487 = vadd.f32 %v1479, %v1485
    %v1488 = vadd.f32 %v1480, %v1485
    %v1489 = vadd.f32 %v1481, %v1485
    %v1490 = vadd.f32 %v1482, %v1485
    %vm1491 = vcmask 261120
    %1492 = vst.msk [vmem:[#allocation11] sm:$0xff] %vm1491, %v1487
    %1493 = vst.msk [vmem:[#allocation11 + $0x8] sm:$0xff] %vm1491, %v1488
    %1494 = vst.msk [vmem:[#allocation11 + $0x10] sm:$0xff] %vm1491, %v1489
    %1495 = vst.msk [vmem:[#allocation11 + $0x18] sm:$0xff] %vm1491, %v1490
    %v1496 = vmul.f32 %v1364, 0.25
    %v1497 = vmul.f32 %v1365, 0.25
    %v1498 = vmul.f32 %v1366, 0.25
    %v1499 = vmul.f32 %v1367, 0.25
    %1500 = vst.msk [vmem:[#allocation12] sm:$0xff] %vm342, %v1496
    %1501 = vst.msk [vmem:[#allocation12 + $0x8] sm:$0xff] %vm342, %v1497
    %1502 = vst.msk [vmem:[#allocation12 + $0x10] sm:$0xff] %vm342, %v1498
    %1503 = vst.msk [vmem:[#allocation12 + $0x18] sm:$0xff] %vm342, %v1499
    // Predicated region
    $region54: #{tpu_custom_call.1} parent=1 // pred_check
      _
    $region55: #{tpu_custom_call.1} parent=1 // pred_check_branch
      %1505 = sbr.rel (0) target = $region57
    $region56: #{tpu_custom_call.1} parent=1 // pred_region
      %1507 = vsyncadd [#allocation4], 0
      %s1508 = sshll.u32 [#allocation11], 4
      %s1509 = int_to_ptr.vmem [resolvable:$true] %s1508
      %s1510 = sshll.u32 %s8, 4
      %s1511 = int_to_ptr.hbm [resolvable:$true] %s1510
      %1516 = dma.vmem_to_hbm [thread:$0]  %s1509, 512, %s1511, [#allocation4], 128, 128, 8
    $region57: #{tpu_custom_call.1} parent=1 // pred_fallthru
      _
    // Predicated region
    $region58: #{tpu_custom_call.1} parent=1 // pred_check
      _
    $region59: #{tpu_custom_call.1} parent=1 // pred_check_branch
      %1518 = sbr.rel (0) target = $region61
    $region60: #{tpu_custom_call.1} parent=1 // pred_region
      %1520 = vsyncadd [#allocation13], 0
      %s1521 = sshll.u32 [#allocation12], 4
      %s1522 = int_to_ptr.vmem [resolvable:$true] %s1521
      %s1523 = sshll.u32 %s9, 4
      %s1524 = int_to_ptr.hbm [resolvable:$true] %s1523
      %1529 = dma.vmem_to_hbm [thread:$0]  %s1522, 512, %s1524, [#allocation13], 128, 128, 8
    $region61: #{tpu_custom_call.1} parent=1 // pred_fallthru
      _
    // Predicated region
    $region62: #{tpu_custom_call.1} parent=1 // pred_check
      _
    $region63: #{tpu_custom_call.1} parent=1 // pred_check_branch
      %1531 = sbr.rel (0) target = $region65
    $region64: #{tpu_custom_call.1} parent=1 // pred_region
      %1533 = dma.done [#allocation4], 512
    $region65: #{tpu_custom_call.1} parent=1 // pred_fallthru
      _
    // Predicated region
    $region66: #{tpu_custom_call.1} parent=1 // pred_check
      _
    $region67: #{tpu_custom_call.1} parent=1 // pred_check_branch
      %1535 = sbr.rel (0) target = $region69
    $region68: #{tpu_custom_call.1} parent=1 // pred_region
      %1537 = dma.done [#allocation13], 512
    $region69: #{tpu_custom_call.1} parent=1 // pred_fallthru
      _
    %1538 = vsyncpa [#allocation3], 1
    %1539 = vsyncpa [#allocation6], 1
    %1540 = vsyncpa [#allocation9], 1
    %1541 = vsyncpa [#allocation4], 1
    %1542 = vsyncpa [#allocation13], 1

</llo_original>
